<compile_context>
chip_gen: v5e
topology: v5e:2x2
jax: 0.10.0
libtpu: 0.0.40
codegen_flags: <defaults>
</compile_context>

<pallas_src>
import jax
import jax.numpy as jnp
import numpy as np
from jax.experimental import pallas as pl
from jax.experimental.pallas import tpu as pltpu


def _fourier_kernel(hi_ref, hs_ref, w2_ref, bf_ref, wo_ref, bo_ref,
                    out_ref, emb_ref):
    D = hi_ref.shape[0]          # in_dim
    F = wo_ref.shape[0]          # fourier_dim

    hi_t = hi_ref[...]           # [D, tb]   h_i^T
    hs_t = hs_ref[...]           # [D, tb]   h_src^T

    # Row-wise outer product, transposed: z^T[d*D + k, b] = hs[b,d] * hi[b,k].
    # Built with sublane-broadcast multiplies + sublane concat (no lane
    # shuffles, no replication-matrix matmuls).
    z_t = jnp.concatenate([hi_t * hs_t[d:d + 1, :] for d in range(D)], axis=0)

    # proj^T = W2 @ z^T + Bf @ h_src^T        [F, tb]
    # (algebraic fold of the freq Linear + einsum; W2/Bf prepared in wrapper)
    proj = (jnp.dot(w2_ref[...], z_t, preferred_element_type=jnp.float32)
            + jnp.dot(bf_ref[...], hs_t, preferred_element_type=jnp.float32))

    # Two EUP transcendentals only; 2p / 4p via double-angle identities (VPU).
    s1 = jnp.sin(proj)
    c1 = jnp.cos(proj)
    s2 = 2.0 * s1 * c1
    c2 = 1.0 - 2.0 * s1 * s1
    s4 = 2.0 * s2 * c2
    c4 = 1.0 - 2.0 * s2 * s2

    # Sublane-direction "concat": plain stores into the (6F, tb) VMEM scratch.
    for j, term in enumerate((s1, c1, s2, c2, s4, c4)):
        emb_ref[pl.ds(j * F, F), :] = term

    # Single fused output projection: [F, 6F] @ [6F, tb]  (+ bias [F, 1]).
    out = (jnp.dot(wo_ref[...], emb_ref[...],
                   preferred_element_type=jnp.float32) + bo_ref[...])
    out_ref[...] = out.astype(out_ref.dtype)


def _round_up(x, m):
    return ((x + m - 1) // m) * m


def _min_grid_blocks():
    # v7x has 2 TensorCores per chip: prefer >=2 grid blocks so the
    # "parallel" batch axis can be sharded across them.  Best-effort probe;
    # on v5e/v6e (1 TC) a single fat tile minimizes per-step grid overhead.
    try:
        kind = jax.devices()[0].device_kind.lower()
        if "v7" in kind or "7x" in kind:
            return 2
    except Exception:
        pass
    return 1


def fourier_base_dynamic(h_src, h_i, params, *, fourier_dim, block_e=None):
    """h_src, h_i: [E, in_dim] float32 -> [E, fourier_dim] float32."""
    E, D = h_src.shape
    F = fourier_dim

    if block_e is None:
        e128 = _round_up(E, 128)
        block_e = min(1024, max(128, _round_up(pl.cdiv(e128, _min_grid_blocks()),
                                               128)))
    else:
        block_e = max(128, _round_up(block_e, 128))   # lane dim: multiple of 128

    n_blocks = pl.cdiv(E, block_e)
    e_pad = n_blocks * block_e

    # Batch-on-lanes layout: transpose inputs to [D, E] (layout plumbing),
    # pad the lane axis so the grid covers E exactly.
    hi_t = jnp.asarray(h_i, jnp.float32).T
    hs_t = jnp.asarray(h_src, jnp.float32).T
    if e_pad != E:
        hi_t = jnp.pad(hi_t, ((0, 0), (0, e_pad - E)))
        hs_t = jnp.pad(hs_t, ((0, 0), (0, e_pad - E)))

    # ---- wrapper-side constant folding (no transposes needed) ----
    # proj^T[f, b] = sum_{d,k} Wf[f*D+d, k] * h_src[b,d] * h_i[b,k]
    #              + sum_d     bf[f*D+d]    * h_src[b,d]
    w2 = jnp.asarray(params["w_freq"], jnp.float32).reshape(F, D * D)  # [F, D*D]
    bf = jnp.asarray(params["b_freq"], jnp.float32).reshape(F, D)      # [F, D]
    wo = jnp.asarray(params["w_out"], jnp.float32)                     # [F, 6F]
    bo = jnp.asarray(params["b_out"], jnp.float32).reshape(F, 1)       # [F, 1]

    row = lambda i: (0, i)
    const = lambda i: (0, 0)

    out_t = pl.pallas_call(
        _fourier_kernel,
        out_shape=jax.ShapeDtypeStruct((F, e_pad), jnp.float32),
        grid_spec=pltpu.PrefetchScalarGridSpec(
            num_scalar_prefetch=0,
            grid=(n_blocks,),
            in_specs=[
                pl.BlockSpec((D, block_e), row),     # h_i^T
                pl.BlockSpec((D, block_e), row),     # h_src^T
                pl.BlockSpec((F, D * D), const),     # folded w_freq
                pl.BlockSpec((F, D), const),         # folded b_freq
                pl.BlockSpec((F, 6 * F), const),     # w_out
                pl.BlockSpec((F, 1), const),         # b_out
            ],
            out_specs=pl.BlockSpec((F, block_e), row),
            scratch_shapes=[pltpu.VMEM((6 * F, block_e), jnp.float32)],
        ),
        compiler_params=pltpu.CompilerParams(
            dimension_semantics=("parallel",)),
    )(hi_t, hs_t, w2, bf, wo, bo)

    # Back to [E, F] (layout plumbing; the slice is a no-op when e_pad == E).
    return out_t[:, :E].T


def init_params(key, in_dim, fourier_dim):
    """Deterministic init matching nn.Linear shapes (uniform +/- 1/sqrt(fan_in))."""
    D, F = in_dim, fourier_dim
    k1, k2, k3, k4 = jax.random.split(key, 4)
    lim_f = 1.0 / np.sqrt(D)
    lim_o = 1.0 / np.sqrt(6 * F)
    return {
        # freq_generator: Linear(D, F*D)  -> weight [F*D, D], bias [F*D]
        "w_freq": jax.random.uniform(k1, (F * D, D), jnp.float32, -lim_f, lim_f),
        "b_freq": jax.random.uniform(k2, (F * D,), jnp.float32, -lim_f, lim_f),
        # out_proj: Linear(6F, F) -> weight [F, 6F], bias [F]
        "w_out": jax.random.uniform(k3, (F, 6 * F), jnp.float32, -lim_o, lim_o),
        "b_out": jax.random.uniform(k4, (F,), jnp.float32, -lim_o, lim_o),
        # phase_generator (Linear(D, F)) exists in __init__ but is unused in
        # forward(); omitted on purpose.
    }


def reference(h_src, h_i, params, fourier_dim):
    B, D = h_src.shape
    F = fourier_dim
    freqs = (h_i @ params["w_freq"].T + params["b_freq"]).reshape(B, F, D)
    proj = jnp.einsum("bfd,bd->bf", freqs, h_src)
    emb = jnp.concatenate(
        [jnp.sin(proj), jnp.cos(proj),
         jnp.sin(2 * proj), jnp.cos(2 * proj),
         jnp.sin(4 * proj), jnp.cos(4 * proj)], axis=-1)
    return emb @ params["w_out"].T + params["b_out"]


if __name__ == "__main__":
    E, IN_DIM, FOURIER_DIM = 128, 8, 32

    key = jax.random.PRNGKey(0)
    k_src, k_i, k_p = jax.random.split(key, 3)
    h_src = jax.random.normal(k_src, (E, IN_DIM), jnp.float32)
    h_i = jax.random.normal(k_i, (E, IN_DIM), jnp.float32)
    params = init_params(k_p, IN_DIM, FOURIER_DIM)

    out = fourier_base_dynamic(h_src, h_i, params, fourier_dim=FOURIER_DIM)
    out = jax.block_until_ready(out)

    ref = jax.block_until_ready(reference(h_src, h_i, params, FOURIER_DIM))
    # Relaxed tolerance: double-angle identities and the algebraic fold change
    # rounding order (observed differences ~1e-6..1e-5, well inside 2e-4).
    np.testing.assert_allclose(np.asarray(out), np.asarray(ref),
                               rtol=2e-4, atol=2e-4)
    print("KERNEL_OK")
</pallas_src>

<mosaic_0001>
module attributes {stable_mosaic.version = 11 : i64} {
  func.func @_fourier_kernel(%arg0: i32, %arg1: memref<8x128xf32, #tpu.memory_space<vmem>>, %arg2: memref<8x128xf32, #tpu.memory_space<vmem>>, %arg3: memref<32x64xf32, #tpu.memory_space<vmem>>, %arg4: memref<32x8xf32, #tpu.memory_space<vmem>>, %arg5: memref<32x192xf32, #tpu.memory_space<vmem>>, %arg6: memref<32x1xf32, #tpu.memory_space<vmem>>, %arg7: memref<32x128xf32, #tpu.memory_space<vmem>>, %arg8: memref<192x128xf32, #tpu.memory_space<vmem>>) attributes {dimension_semantics = [#tpu.dimension_semantics<parallel>], iteration_bounds = array<i64: 1>, scalar_prefetch = 0 : i64, scratch_operands = 1 : i64, tpu.core_type = #tpu.core_type<tc>, window_params = [{transform_indices = @transform_0, window_bounds = array<i64: 8, 128>}, {transform_indices = @transform_1, window_bounds = array<i64: 8, 128>}, {pipeline_mode = #tpu.pipeline_mode<synchronous>, transform_indices = @transform_2, window_bounds = array<i64: 32, 64>}, {pipeline_mode = #tpu.pipeline_mode<synchronous>, transform_indices = @transform_3, window_bounds = array<i64: 32, 8>}, {pipeline_mode = #tpu.pipeline_mode<synchronous>, transform_indices = @transform_4, window_bounds = array<i64: 32, 192>}, {pipeline_mode = #tpu.pipeline_mode<synchronous>, transform_indices = @transform_5, window_bounds = array<i64: 32, 1>}, {transform_indices = @transform_6, window_bounds = array<i64: 32, 128>}]} {
    %c0 = arith.constant 0 : index
    %c0_0 = arith.constant 0 : index
    %0 = vector.load %arg1[%c0, %c0_0] : memref<8x128xf32, #tpu.memory_space<vmem>>, vector<8x128xf32>
    %c0_1 = arith.constant 0 : index
    %c0_2 = arith.constant 0 : index
    %1 = vector.load %arg2[%c0_1, %c0_2] : memref<8x128xf32, #tpu.memory_space<vmem>>, vector<8x128xf32>
    %2 = vector.extract_strided_slice %1 {offsets = [0, 0], sizes = [1, 128], strides = [1, 1]} : vector<8x128xf32> to vector<1x128xf32>
    %3 = vector.broadcast %2 : vector<1x128xf32> to vector<8x128xf32>
    %4 = arith.mulf %0, %3 : vector<8x128xf32>
    %5 = vector.extract_strided_slice %1 {offsets = [1, 0], sizes = [1, 128], strides = [1, 1]} : vector<8x128xf32> to vector<1x128xf32>
    %6 = vector.broadcast %5 : vector<1x128xf32> to vector<8x128xf32>
    %7 = arith.mulf %0, %6 : vector<8x128xf32>
    %8 = vector.extract_strided_slice %1 {offsets = [2, 0], sizes = [1, 128], strides = [1, 1]} : vector<8x128xf32> to vector<1x128xf32>
    %9 = vector.broadcast %8 : vector<1x128xf32> to vector<8x128xf32>
    %10 = arith.mulf %0, %9 : vector<8x128xf32>
    %11 = vector.extract_strided_slice %1 {offsets = [3, 0], sizes = [1, 128], strides = [1, 1]} : vector<8x128xf32> to vector<1x128xf32>
    %12 = vector.broadcast %11 : vector<1x128xf32> to vector<8x128xf32>
    %13 = arith.mulf %0, %12 : vector<8x128xf32>
    %14 = vector.extract_strided_slice %1 {offsets = [4, 0], sizes = [1, 128], strides = [1, 1]} : vector<8x128xf32> to vector<1x128xf32>
    %15 = vector.broadcast %14 : vector<1x128xf32> to vector<8x128xf32>
    %16 = arith.mulf %0, %15 : vector<8x128xf32>
    %17 = vector.extract_strided_slice %1 {offsets = [5, 0], sizes = [1, 128], strides = [1, 1]} : vector<8x128xf32> to vector<1x128xf32>
    %18 = vector.broadcast %17 : vector<1x128xf32> to vector<8x128xf32>
    %19 = arith.mulf %0, %18 : vector<8x128xf32>
    %20 = vector.extract_strided_slice %1 {offsets = [6, 0], sizes = [1, 128], strides = [1, 1]} : vector<8x128xf32> to vector<1x128xf32>
    %21 = vector.broadcast %20 : vector<1x128xf32> to vector<8x128xf32>
    %22 = arith.mulf %0, %21 : vector<8x128xf32>
    %23 = vector.extract_strided_slice %1 {offsets = [7, 0], sizes = [1, 128], strides = [1, 1]} : vector<8x128xf32> to vector<1x128xf32>
    %24 = vector.broadcast %23 : vector<1x128xf32> to vector<8x128xf32>
    %25 = arith.mulf %0, %24 : vector<8x128xf32>
    %26 = tpu.concatenate %4, %7, %10, %13, %16, %19, %22, %25 in 0 : vector<8x128xf32>, vector<8x128xf32>, vector<8x128xf32>, vector<8x128xf32>, vector<8x128xf32>, vector<8x128xf32>, vector<8x128xf32>, vector<8x128xf32> -> vector<64x128xf32>
    %c0_3 = arith.constant 0 : index
    %c0_4 = arith.constant 0 : index
    %27 = vector.load %arg3[%c0_3, %c0_4] : memref<32x64xf32, #tpu.memory_space<vmem>>, vector<32x64xf32>
    %cst = arith.constant dense<0.000000e+00> : vector<32x128xf32>
    %28 = tpu.matmul %27, %26, %cst {dimension_numbers = #tpu.dot_dimension_numbers<[1], [0], [0], [1], [0, 0, 1, 1], [], []>} : vector<32x64xf32>, vector<64x128xf32>, vector<32x128xf32> -> vector<32x128xf32>
    %c0_5 = arith.constant 0 : index
    %c0_6 = arith.constant 0 : index
    %29 = vector.load %arg4[%c0_5, %c0_6] : memref<32x8xf32, #tpu.memory_space<vmem>>, vector<32x8xf32>
    %cst_7 = arith.constant dense<0.000000e+00> : vector<32x128xf32>
    %30 = tpu.matmul %29, %1, %cst_7 {dimension_numbers = #tpu.dot_dimension_numbers<[1], [0], [0], [1], [0, 0, 1, 1], [], []>} : vector<32x8xf32>, vector<8x128xf32>, vector<32x128xf32> -> vector<32x128xf32>
    %31 = arith.addf %28, %30 : vector<32x128xf32>
    %32 = math.sin %31 : vector<32x128xf32>
    %33 = math.cos %31 : vector<32x128xf32>
    %cst_8 = arith.constant 2.000000e+00 : f32
    %34 = vector.broadcast %cst_8 : f32 to vector<32x128xf32>
    %35 = arith.mulf %34, %32 : vector<32x128xf32>
    %36 = arith.mulf %35, %33 : vector<32x128xf32>
    %cst_9 = arith.constant 2.000000e+00 : f32
    %37 = vector.broadcast %cst_9 : f32 to vector<32x128xf32>
    %38 = arith.mulf %37, %32 : vector<32x128xf32>
    %39 = arith.mulf %38, %32 : vector<32x128xf32>
    %cst_10 = arith.constant 1.000000e+00 : f32
    %40 = vector.broadcast %cst_10 : f32 to vector<32x128xf32>
    %41 = arith.subf %40, %39 : vector<32x128xf32>
    %cst_11 = arith.constant 2.000000e+00 : f32
    %42 = vector.broadcast %cst_11 : f32 to vector<32x128xf32>
    %43 = arith.mulf %42, %36 : vector<32x128xf32>
    %44 = arith.mulf %43, %41 : vector<32x128xf32>
    %cst_12 = arith.constant 2.000000e+00 : f32
    %45 = vector.broadcast %cst_12 : f32 to vector<32x128xf32>
    %46 = arith.mulf %45, %36 : vector<32x128xf32>
    %47 = arith.mulf %46, %36 : vector<32x128xf32>
    %cst_13 = arith.constant 1.000000e+00 : f32
    %48 = vector.broadcast %cst_13 : f32 to vector<32x128xf32>
    %49 = arith.subf %48, %47 : vector<32x128xf32>
    %c0_14 = arith.constant 0 : index
    %c0_15 = arith.constant 0 : index
    %50 = vector.load %arg8[%c0_14, %c0_15] : memref<192x128xf32, #tpu.memory_space<vmem>>, vector<32x128xf32>
    tpu.vector_store %arg8[%c0_14, %c0_15], %32 {strides = array<i32>} : memref<192x128xf32, #tpu.memory_space<vmem>>, vector<32x128xf32>,
    %c32 = arith.constant 32 : index
    %c0_16 = arith.constant 0 : index
    %51 = vector.load %arg8[%c32, %c0_16] : memref<192x128xf32, #tpu.memory_space<vmem>>, vector<32x128xf32>
    tpu.vector_store %arg8[%c32, %c0_16], %33 {strides = array<i32>} : memref<192x128xf32, #tpu.memory_space<vmem>>, vector<32x128xf32>,
    %c64 = arith.constant 64 : index
    %c0_17 = arith.constant 0 : index
    %52 = vector.load %arg8[%c64, %c0_17] : memref<192x128xf32, #tpu.memory_space<vmem>>, vector<32x128xf32>
    tpu.vector_store %arg8[%c64, %c0_17], %36 {strides = array<i32>} : memref<192x128xf32, #tpu.memory_space<vmem>>, vector<32x128xf32>,
    %c96 = arith.constant 96 : index
    %c0_18 = arith.constant 0 : index
    %53 = vector.load %arg8[%c96, %c0_18] : memref<192x128xf32, #tpu.memory_space<vmem>>, vector<32x128xf32>
    tpu.vector_store %arg8[%c96, %c0_18], %41 {strides = array<i32>} : memref<192x128xf32, #tpu.memory_space<vmem>>, vector<32x128xf32>,
    %c128 = arith.constant 128 : index
    %c0_19 = arith.constant 0 : index
    %54 = vector.load %arg8[%c128, %c0_19] : memref<192x128xf32, #tpu.memory_space<vmem>>, vector<32x128xf32>
    tpu.vector_store %arg8[%c128, %c0_19], %44 {strides = array<i32>} : memref<192x128xf32, #tpu.memory_space<vmem>>, vector<32x128xf32>,
    %c160 = arith.constant 160 : index
    %c0_20 = arith.constant 0 : index
    %55 = vector.load %arg8[%c160, %c0_20] : memref<192x128xf32, #tpu.memory_space<vmem>>, vector<32x128xf32>
    tpu.vector_store %arg8[%c160, %c0_20], %49 {strides = array<i32>} : memref<192x128xf32, #tpu.memory_space<vmem>>, vector<32x128xf32>,
    %c0_21 = arith.constant 0 : index
    %c0_22 = arith.constant 0 : index
    %56 = vector.load %arg5[%c0_21, %c0_22] : memref<32x192xf32, #tpu.memory_space<vmem>>, vector<32x192xf32>
    %c0_23 = arith.constant 0 : index
    %c0_24 = arith.constant 0 : index
    %57 = vector.load %arg8[%c0_23, %c0_24] : memref<192x128xf32, #tpu.memory_space<vmem>>, vector<192x128xf32>
    %cst_25 = arith.constant dense<0.000000e+00> : vector<32x128xf32>
    %58 = tpu.matmul %56, %57, %cst_25 {dimension_numbers = #tpu.dot_dimension_numbers<[1], [0], [0], [1], [0, 0, 1, 1], [], []>} : vector<32x192xf32>, vector<192x128xf32>, vector<32x128xf32> -> vector<32x128xf32>
    %c0_26 = arith.constant 0 : index
    %c0_27 = arith.constant 0 : index
    %59 = vector.load %arg6[%c0_26, %c0_27] : memref<32x1xf32, #tpu.memory_space<vmem>>, vector<32x1xf32>
    %60 = vector.broadcast %59 : vector<32x1xf32> to vector<32x128xf32>
    %61 = arith.addf %58, %60 : vector<32x128xf32>
    %c0_28 = arith.constant 0 : index
    %c0_29 = arith.constant 0 : index
    %62 = vector.load %arg7[%c0_28, %c0_29] : memref<32x128xf32, #tpu.memory_space<vmem>>, vector<32x128xf32>
    tpu.vector_store %arg7[%c0_28, %c0_29], %61 {strides = array<i32>} : memref<32x128xf32, #tpu.memory_space<vmem>>, vector<32x128xf32>,
    return
  }
  func.func @transform_0(%arg0: i32) -> (i32, i32) {
    %c0_i32 = arith.constant 0 : i32
    %c0_i32_0 = arith.constant 0 : i32
    return %c0_i32, %arg0 : i32, i32
  }
  func.func @transform_1(%arg0: i32) -> (i32, i32) {
    %c0_i32 = arith.constant 0 : i32
    %c0_i32_0 = arith.constant 0 : i32
    return %c0_i32, %arg0 : i32, i32
  }
  func.func @transform_2(%arg0: i32) -> (i32, i32) {
    %c0_i32 = arith.constant 0 : i32
    %c0_i32_0 = arith.constant 0 : i32
    %c0_i32_1 = arith.constant 0 : i32
    return %c0_i32, %c0_i32_0 : i32, i32
  }
  func.func @transform_3(%arg0: i32) -> (i32, i32) {
    %c0_i32 = arith.constant 0 : i32
    %c0_i32_0 = arith.constant 0 : i32
    %c0_i32_1 = arith.constant 0 : i32
    return %c0_i32, %c0_i32_0 : i32, i32
  }
  func.func @transform_4(%arg0: i32) -> (i32, i32) {
    %c0_i32 = arith.constant 0 : i32
    %c0_i32_0 = arith.constant 0 : i32
    %c0_i32_1 = arith.constant 0 : i32
    return %c0_i32, %c0_i32_0 : i32, i32
  }
  func.func @transform_5(%arg0: i32) -> (i32, i32) {
    %c0_i32 = arith.constant 0 : i32
    %c0_i32_0 = arith.constant 0 : i32
    %c0_i32_1 = arith.constant 0 : i32
    return %c0_i32, %c0_i32_0 : i32, i32
  }
  func.func @transform_6(%arg0: i32) -> (i32, i32) {
    %c0_i32 = arith.constant 0 : i32
    %c0_i32_0 = arith.constant 0 : i32
    return %c0_i32, %arg0 : i32, i32
  }
}

</mosaic_0001>

<llo_original>
// kernel: tpu_custom_call.1
$region0: #{tpu_custom_call.1}
  #allocation0 [shape = 'u32[]', space=smem, size = 0x4, offset = 0x4, fixed_abs, tag = 'smem constant byte address 0x4 - core index']
  #allocation1 [shape = 'u32[72,128]{1,0:T(1,128)}', space=vmem, size = 0x9000, scoped, tag = 'internal scratch']
  #allocation2 [shape = 'f32[192,128]{1,0:T(8,128)}', space=vmem, size = 0x18000, scoped, tag = 'scratch operand']
  %s0 = inlined_call_operand.vmem [shape: f32[8,128], index: 0, kind: input, shape index: {}]
  %s1 = inlined_call_operand.hbm [shape: f32[8,128], index: 1, kind: input, shape index: {}]
  %s2 = inlined_call_operand.hbm [shape: f32[32,64], index: 2, kind: input, shape index: {}]
  %s3 = inlined_call_operand.vmem [shape: f32[32,8], index: 3, kind: input, shape index: {}]
  %s4 = inlined_call_operand.vmem [shape: f32[32,192], index: 4, kind: input, shape index: {}]
  %s5 = inlined_call_operand.vmem [shape: f32[32,1], index: 5, kind: input, shape index: {}]
  %s6 = inlined_call_operand.hbm [shape: f32[32,128], index: 6, kind: output, shape index: {}]
  %s7 = sld [smem:[#allocation0]]
  $region42: #{tpu_custom_call.1} parent=0
    _
  %s9 = ssub.s32 1, %s7
  %s10 = scalar_select 0, %s9, %s7
  $region1: #{tpu_custom_call.1} parent=0
    #allocation3 [shape = 'u8[4096]{0}', space=vmem, size = 0x1000, scoped, tag = 'input window, operand 1, single buffered']
    #allocation4 [shape = 's32[1]{0}', space=sflag, size = 0x4, scoped, tag = 'scoped memory for tpu_custom_call.1']
    #allocation5 [shape = 's32[1]{0}', space=sflag, size = 0x4, scoped, tag = 'scoped memory for tpu_custom_call.1']
    #allocation6 [shape = 'u8[16384]{0}', space=vmem, size = 0x4000, scoped, tag = 'input window, operand 2, single buffered']
    #allocation7 [shape = 's32[1]{0}', space=sflag, size = 0x4, scoped, tag = 'scoped memory for tpu_custom_call.1']
    #allocation8 [shape = 'u8[16384]{0}', space=vmem, size = 0x4000, scoped, tag = 'output window, operand 0, single buffered']
    %11 = vsyncpa [#allocation4], 0
    %12 = vsyncpa [#allocation7], 0
    %13 = vsyncpa [#allocation5], 0
    // Predicated region
    $region2: #{tpu_custom_call.1} parent=1 // pred_check
      _
    $region3: #{tpu_custom_call.1} parent=1 // pred_check_branch
      %15 = sbr.rel (0) target = $region5
    $region4: #{tpu_custom_call.1} parent=1 // pred_region
      _
    $region5: #{tpu_custom_call.1} parent=1 // pred_fallthru
      _
    // Predicated region
    $region6: #{tpu_custom_call.1} parent=1 // pred_check
      _
    $region7: #{tpu_custom_call.1} parent=1 // pred_check_branch
      %17 = sbr.rel (0) target = $region9
    $region8: #{tpu_custom_call.1} parent=1 // pred_region
      %19 = vsyncadd [#allocation4], 0
      %s21 = sshll.u32 %s1, 4
      %s22 = int_to_ptr.hbm [resolvable:$true] %s21
      %s23 = sshll.u32 [#allocation3], 4
      %s24 = int_to_ptr.vmem [resolvable:$true] %s23
      %26 = dma.hbm_to_vmem [thread:$0]  %s22, 128, %s24, [#allocation4]
    $region9: #{tpu_custom_call.1} parent=1 // pred_fallthru
      _
    // Predicated region
    $region10: #{tpu_custom_call.1} parent=1 // pred_check
      _
    $region11: #{tpu_custom_call.1} parent=1 // pred_check_branch
      %28 = sbr.rel (0) target = $region13
    $region12: #{tpu_custom_call.1} parent=1 // pred_region
      %30 = vsyncadd [#allocation7], 0
      %s31 = sshll.u32 %s2, 4
      %s32 = int_to_ptr.hbm [resolvable:$true] %s31
      %s33 = sshll.u32 [#allocation6], 4
      %s34 = int_to_ptr.vmem [resolvable:$true] %s33
      %39 = dma.hbm_to_vmem [thread:$0]  %s32, 512, %s34, [#allocation7], 128, 128, 8
    $region13: #{tpu_custom_call.1} parent=1 // pred_fallthru
      _
    // Predicated region
    $region14: #{tpu_custom_call.1} parent=1 // pred_check
      _
    $region15: #{tpu_custom_call.1} parent=1 // pred_check_branch
      %41 = sbr.rel (0) target = $region17
    $region16: #{tpu_custom_call.1} parent=1 // pred_region
      _
    $region17: #{tpu_custom_call.1} parent=1 // pred_fallthru
      _
    // Predicated region
    $region18: #{tpu_custom_call.1} parent=1 // pred_check
      _
    $region19: #{tpu_custom_call.1} parent=1 // pred_check_branch
      %43 = sbr.rel (0) target = $region21
    $region20: #{tpu_custom_call.1} parent=1 // pred_region
      _
    $region21: #{tpu_custom_call.1} parent=1 // pred_fallthru
      _
    // Predicated region
    $region22: #{tpu_custom_call.1} parent=1 // pred_check
      _
    $region23: #{tpu_custom_call.1} parent=1 // pred_check_branch
      %45 = sbr.rel (0) target = $region25
    $region24: #{tpu_custom_call.1} parent=1 // pred_region
      _
    $region25: #{tpu_custom_call.1} parent=1 // pred_fallthru
      _
    // Predicated region
    $region26: #{tpu_custom_call.1} parent=1 // pred_check
      _
    $region27: #{tpu_custom_call.1} parent=1 // pred_check_branch
      %47 = sbr.rel (0) target = $region29
    $region28: #{tpu_custom_call.1} parent=1 // pred_region
      %49 = dma.done [#allocation4], 128
    $region29: #{tpu_custom_call.1} parent=1 // pred_fallthru
      _
    // Predicated region
    $region30: #{tpu_custom_call.1} parent=1 // pred_check
      _
    $region31: #{tpu_custom_call.1} parent=1 // pred_check_branch
      %51 = sbr.rel (0) target = $region33
    $region32: #{tpu_custom_call.1} parent=1 // pred_region
      %53 = dma.done [#allocation7], 512
    $region33: #{tpu_custom_call.1} parent=1 // pred_fallthru
      _
    %v54 = vld [vmem:[%s0] sm:$0xff]
    %v55 = vld [vmem:[#allocation3] sm:$0xff]
    %v56 = vperm.slane %v55, 0
    %v57 = vmul.f32 %v54, %v56
    %v58 = vperm.slane %v55, 1
    %v59 = vmul.f32 %v54, %v58
    %v60 = vperm.slane %v55, 2
    %v61 = vmul.f32 %v54, %v60
    %v62 = vperm.slane %v55, 3
    %v63 = vmul.f32 %v54, %v62
    %v64 = vperm.slane %v55, 4
    %v65 = vmul.f32 %v54, %v64
    %v66 = vperm.slane %v55, 5
    %v67 = vmul.f32 %v54, %v66
    %v68 = vperm.slane %v55, 6
    %v69 = vmul.f32 %v54, %v68
    %v70 = vperm.slane %v55, 7
    %v71 = vmul.f32 %v54, %v70
    %v72 = vld [vmem:[#allocation6] sm:$0xff]
    %v73 = vld [vmem:[#allocation6 + $0x8] sm:$0xff]
    %v74 = vld [vmem:[#allocation6 + $0x10] sm:$0xff]
    %v75 = vld [vmem:[#allocation6 + $0x18] sm:$0xff]
    %v76 = vld [vmem:[%s3] sm:$0xff]
    %v77 = vld [vmem:[%s3 + $0x8] sm:$0xff]
    %v78 = vld [vmem:[%s3 + $0x10] sm:$0xff]
    %v79 = vld [vmem:[%s3 + $0x18] sm:$0xff]
    %vm80 = vcmask 64512
    %v82 = vsel %vm80, %v76, 0
    %v85 = vsel %vm80, %v77, 0
    %v88 = vsel %vm80, %v78, 0
    %v91 = vsel %vm80, %v79, 0
    %93 = vmatpush.msra.mxu0 0.0
    %94 = vmatpush.msra.mxu0 0.0
    %95 = vmatpush.msra.mxu0 0.0
    %96 = vmatpush.msra.mxu0 0.0
    %97 = vmatpush.msra.mxu0 0.0
    %98 = vmatpush.msra.mxu0 0.0
    %99 = vmatpush.msra.mxu0 0.0
    %100 = vmatpush.msra.mxu0 0.0
    %101 = vmatpush.msra.mxu0 0.0
    %102 = vmatpush.msra.mxu0 0.0
    %103 = vmatpush.msra.mxu0 0.0
    %104 = vmatpush.msra.mxu0 0.0
    %105 = vmatpush.msra.mxu0 0.0
    %106 = vmatpush.msra.mxu0 0.0
    %107 = vmatpush.msra.mxu0 0.0
    %108 = vmatpush.msra.mxu0 %v55
    %109 = vmatmul.f32.gmra.mxu0 %v82
    %v110 = vpop.f32.mrf.mxu0
    %v111 = vadd.f32 0.0, %v110
    %112 = vmatmul.f32.gmra.mxu0 %v85
    %v113 = vpop.f32.mrf.mxu0
    %v114 = vadd.f32 0.0, %v113
    %115 = vmatmul.f32.gmra.mxu0 %v88
    %v116 = vpop.f32.mrf.mxu0
    %v117 = vadd.f32 0.0, %v116
    %118 = vmatmul.f32.gmra.mxu0 %v91
    %v119 = vpop.f32.mrf.mxu0
    %v120 = vadd.f32 0.0, %v119
    %121 = vdwg.mxu0
    %vm122 = vcmask 523264
    %v124 = vsel %vm122, %v72, 0
    %v127 = vsel %vm122, %v73, 0
    %v130 = vsel %vm122, %v74, 0
    %v133 = vsel %vm122, %v75, 0
    %135 = vmatpush.msra.mxu0 0.0
    %136 = vmatpush.msra.mxu0 0.0
    %137 = vmatpush.msra.mxu0 0.0
    %138 = vmatpush.msra.mxu0 0.0
    %139 = vmatpush.msra.mxu0 0.0
    %140 = vmatpush.msra.mxu0 0.0
    %141 = vmatpush.msra.mxu0 0.0
    %142 = vmatpush.msra.mxu0 0.0
    %143 = vmatpush.msra.mxu0 %v71
    %144 = vmatpush.msra.mxu0 %v69
    %145 = vmatpush.msra.mxu0 %v67
    %146 = vmatpush.msra.mxu0 %v65
    %147 = vmatpush.msra.mxu0 %v63
    %148 = vmatpush.msra.mxu0 %v61
    %149 = vmatpush.msra.mxu0 %v59
    %150 = vmatpush.msra.mxu0 %v57
    %151 = vmatmul.f32.gmra.mxu0 %v124
    %v152 = vpop.f32.mrf.mxu0
    %v153 = vadd.f32 %v111, %v152
    %154 = vmatmul.f32.gmra.mxu0 %v127
    %v155 = vpop.f32.mrf.mxu0
    %v156 = vadd.f32 %v114, %v155
    %157 = vmatmul.f32.gmra.mxu0 %v130
    %v158 = vpop.f32.mrf.mxu0
    %v159 = vadd.f32 %v117, %v158
    %160 = vmatmul.f32.gmra.mxu0 %v133
    %v161 = vpop.f32.mrf.mxu0
    %v162 = vadd.f32 %v120, %v161
    %163 = vdwg.mxu0
    %v164 = vand.u32 2147483647, %v153
    %vm165 = vcmp.le.f32.partialorder %v164, 0.7853982
    %vm166 = vcmp.lt.s32.totalorder %v153, 0
    %v167 = vand.u32 %v153, 2139095040
    %v168 = vshrl.u32 %v167, 23
    %v169 = vsub.s32 %v168, 127
    %v170 = vand.u32 2147483647, %v153
    %v171 = vand.u32 %v170, 8388607
    %v172 = vor.u32 %v171, 8388608
    %v173 = vsub.s32 0, %v172
    %v174 = vadd.s32 %v169, 1
    %vm175 = vcmp.gt.s32.totalorder %v174, 0
    %v176 = vsel %vm175, %v174, 0
    %v177 = vshrl.u32 %v176, 5
    %v178 = vand.u32 %v176, 31
    %v179 = vsub.s32 32, %v178
    %v180 = vshrl.u32 683565275, %v179
    %v181 = vshll.u32 683565275, %v178
    %v182 = vshrl.u32 2475754826, %v179
    %v183 = vor.u32 %v181, %v182
    %v184 = vshll.u32 2475754826, %v178
    %v185 = vshrl.u32 2131351028, %v179
    %v186 = vor.u32 %v184, %v185
    %v187 = vshll.u32 2131351028, %v178
    %v188 = vshrl.u32 2102212464, %v179
    %v189 = vor.u32 %v187, %v188
    %v190 = vshll.u32 2102212464, %v178
    %v191 = vshrl.u32 920167782, %v179
    %v192 = vor.u32 %v190, %v191
    %v193 = vshll.u32 920167782, %v178
    %v194 = vshrl.u32 1326507024, %v179
    %v195 = vor.u32 %v193, %v194
    %vm196 = vcmp.lt.s32.totalorder %v177, 1
    %vm197 = vcmp.lt.s32.totalorder %v177, 2
    %vm198 = vcmp.lt.s32.totalorder %v177, 3
    %vm199 = vcmp.lt.s32.totalorder %v177, 4
    %v200 = vsel %vm196, %v180, %v183
    %v201 = vsel %vm199, %v189, 2102212464
    %v202 = vsel %vm198, %v186, %v201
    %v203 = vsel %vm197, %v200, %v202
    %v204 = vsel %vm196, %v183, %v186
    %v205 = vsel %vm199, %v192, 920167782
    %v206 = vsel %vm198, %v189, %v205
    %v207 = vsel %vm197, %v204, %v206
    %v208 = vsel %vm196, %v186, %v189
    %v209 = vsel %vm199, %v195, 1326507024
    %v210 = vsel %vm198, %v192, %v209
    %v211 = vsel %vm197, %v208, %v210
    %v212 = vshll.u32 %v172, 8
    %v213 = vand.u32 %v212, 65535
    %v214 = vshrl.u32 %v212, 16
    %v215 = vand.u32 %v211, 65535
    %v216 = vshrl.u32 %v211, 16
    %v217 = vmul.u32 %v213, %v215
    %v218 = vmul.u32 %v213, %v216
    %v219 = vmul.u32 %v214, %v215
    %v220 = vmul.u32 %v214, %v216
    %v221 = vshll.u32 %v218, 16
    %v222 = vshrl.u32 %v218, 16
    %v223 = vshll.u32 %v219, 16
    %v224 = vshrl.u32 %v219, 16
    %vm225 = vc.u32 %v217, %v221
    %v226 = vsel %vm225, 1, 0
    %v227 = vadd.s32 %v217, %v221
    %v228 = vadd.s32 %v220, %v226
    %vm229 = vc.u32 %v227, %v223
    %v230 = vsel %vm229, 1, 0
    %v231 = vadd.s32 %v227, %v223
    %v232 = vadd.s32 %v228, %v230
    %v233 = vadd.s32 %v232, %v222
    %v234 = vadd.s32 %v233, %v224
    %v235 = vand.u32 %v212, 65535
    %v236 = vshrl.u32 %v212, 16
    %v237 = vand.u32 %v207, 65535
    %v238 = vshrl.u32 %v207, 16
    %v239 = vmul.u32 %v235, %v237
    %v240 = vmul.u32 %v235, %v238
    %v241 = vmul.u32 %v236, %v237
    %v242 = vmul.u32 %v236, %v238
    %v243 = vshll.u32 %v240, 16
    %v244 = vshrl.u32 %v240, 16
    %v245 = vshll.u32 %v241, 16
    %v246 = vshrl.u32 %v241, 16
    %vm247 = vc.u32 %v239, %v243
    %v248 = vsel %vm247, 1, 0
    %v249 = vadd.s32 %v239, %v243
    %v250 = vadd.s32 %v242, %v248
    %vm251 = vc.u32 %v249, %v245
    %v252 = vsel %vm251, 1, 0
    %v253 = vadd.s32 %v249, %v245
    %v254 = vadd.s32 %v250, %v252
    %v255 = vadd.s32 %v254, %v244
    %v256 = vadd.s32 %v255, %v246
    %v257 = vmul.u32 %v212, %v203
    %v258 = vadd.s32 %v234, %v253
    %vm259 = vc.u32 %v234, %v253
    %v260 = vadd.s32 %v256, 1
    %v261 = vsel %vm259, %v260, %v256
    %v262 = vadd.s32 %v257, %v261
    %v263 = vadd.s32 %v262, 536870912
    %v264 = vshrl.u32 %v263, 30
    %v265 = vshll.u32 %v264, 30
    %v266 = vsub.s32 %v262, %v265
    %vm267 = vcmp.lt.s32.totalorder %v266, 0
    %v268 = vsub.s32 0, %v266
    %v269 = vsel %vm267, %v268, %v266
    %v270 = vclz %v269
    %v271 = vsub.s32 %v270, 2
    %vm272 = vcmp.gt.s32.totalorder 0, %v271
    %v273 = vsel %vm272, 0, %v271
    %v274 = vsub.s32 32, %v273
    %v275 = vshll.u32 %v266, %v273
    %v276 = vshrl.u32 %v258, %v274
    %v277 = vor.u32 %v275, %v276
    %v278 = vsub.s32 4294967266, %v273
    %v279 = vadd.s32 %v278, 127
    %v280 = vshll.u32 %v279, 23
    %v281 = vor.u32 4788187, %v280
    %v282 = vand.u32 2147483647, %v281
    %v284 = vcvt.s32.f32 %v277
    %v285 = vmul.f32 %v284, %v282
    %v286 = vxor.u32 %v285, 2147483648
    %v287 = vsel %vm166, %v286, %v285
    %v288 = vsub.s32 4, %v264
    %v289 = vsel %vm166, %v288, %v264
    %v290 = vsel %vm165, %v153, %v287
    %v291 = vsel %vm165, 0, %v289
    %v292 = vmul.f32 %v290, %v290
    %v293 = vmul.f32 %v292, -0.001358992
    %v294 = vadd.f32 %v293, 0.041655596
    %v295 = vmul.f32 %v292, %v294
    %v296 = vadd.f32 %v295, -0.4999988
    %v297 = vmul.f32 %v292, %v296
    %v298 = vadd.f32 1.0, %v297
    %v299 = vmul.f32 %v290, %v290
    %v300 = vmul.f32 %v299, -0.00019511016
    %v301 = vadd.f32 %v300, 0.008332121
    %v302 = vmul.f32 %v299, %v301
    %v303 = vadd.f32 %v302, -0.16666654
    %v304 = vmul.f32 %v299, %v303
    %v305 = vadd.f32 %v304, 1.0
    %v306 = vmul.f32 %v305, %v290
    %vm307 = vweird.f32 %v153
    %v308 = vadd.s32 %v291, 3
    %v309 = vand.u32 %v308, 3
    %vm310 = vcmp.lt.s32.totalorder %v309, 2
    %vm311 = vcmp.eq.s32.totalorder %v309, 0
    %v312 = vxor.u32 %v306, 2147483648
    %v313 = vsel %vm311, %v298, %v312
    %vm314 = vcmp.eq.s32.totalorder %v309, 2
    %v315 = vxor.u32 %v298, 2147483648
    %v316 = vsel %vm314, %v315, %v306
    %v317 = vsel %vm310, %v313, %v316
    %v318 = vsel %vm307, nan, %v317
    %v319 = vand.u32 2147483647, %v156
    %vm320 = vcmp.le.f32.partialorder %v319, 0.7853982
    %vm321 = vcmp.lt.s32.totalorder %v156, 0
    %v322 = vand.u32 %v156, 2139095040
    %v323 = vshrl.u32 %v322, 23
    %v324 = vsub.s32 %v323, 127
    %v325 = vand.u32 2147483647, %v156
    %v326 = vand.u32 %v325, 8388607
    %v327 = vor.u32 %v326, 8388608
    %v328 = vsub.s32 0, %v327
    %v329 = vadd.s32 %v324, 1
    %vm330 = vcmp.gt.s32.totalorder %v329, 0
    %v331 = vsel %vm330, %v329, 0
    %v332 = vshrl.u32 %v331, 5
    %v333 = vand.u32 %v331, 31
    %v334 = vsub.s32 32, %v333
    %v335 = vshrl.u32 683565275, %v334
    %v336 = vshll.u32 683565275, %v333
    %v337 = vshrl.u32 2475754826, %v334
    %v338 = vor.u32 %v336, %v337
    %v339 = vshll.u32 2475754826, %v333
    %v340 = vshrl.u32 2131351028, %v334
    %v341 = vor.u32 %v339, %v340
    %v342 = vshll.u32 2131351028, %v333
    %v343 = vshrl.u32 2102212464, %v334
    %v344 = vor.u32 %v342, %v343
    %v345 = vshll.u32 2102212464, %v333
    %v346 = vshrl.u32 920167782, %v334
    %v347 = vor.u32 %v345, %v346
    %v348 = vshll.u32 920167782, %v333
    %v349 = vshrl.u32 1326507024, %v334
    %v350 = vor.u32 %v348, %v349
    %vm351 = vcmp.lt.s32.totalorder %v332, 1
    %vm352 = vcmp.lt.s32.totalorder %v332, 2
    %vm353 = vcmp.lt.s32.totalorder %v332, 3
    %vm354 = vcmp.lt.s32.totalorder %v332, 4
    %v355 = vsel %vm351, %v335, %v338
    %v356 = vsel %vm354, %v344, 2102212464
    %v357 = vsel %vm353, %v341, %v356
    %v358 = vsel %vm352, %v355, %v357
    %v359 = vsel %vm351, %v338, %v341
    %v360 = vsel %vm354, %v347, 920167782
    %v361 = vsel %vm353, %v344, %v360
    %v362 = vsel %vm352, %v359, %v361
    %v363 = vsel %vm351, %v341, %v344
    %v364 = vsel %vm354, %v350, 1326507024
    %v365 = vsel %vm353, %v347, %v364
    %v366 = vsel %vm352, %v363, %v365
    %v367 = vshll.u32 %v327, 8
    %v368 = vand.u32 %v367, 65535
    %v369 = vshrl.u32 %v367, 16
    %v370 = vand.u32 %v366, 65535
    %v371 = vshrl.u32 %v366, 16
    %v372 = vmul.u32 %v368, %v370
    %v373 = vmul.u32 %v368, %v371
    %v374 = vmul.u32 %v369, %v370
    %v375 = vmul.u32 %v369, %v371
    %v376 = vshll.u32 %v373, 16
    %v377 = vshrl.u32 %v373, 16
    %v378 = vshll.u32 %v374, 16
    %v379 = vshrl.u32 %v374, 16
    %vm380 = vc.u32 %v372, %v376
    %v381 = vsel %vm380, 1, 0
    %v382 = vadd.s32 %v372, %v376
    %v383 = vadd.s32 %v375, %v381
    %vm384 = vc.u32 %v382, %v378
    %v385 = vsel %vm384, 1, 0
    %v386 = vadd.s32 %v382, %v378
    %v387 = vadd.s32 %v383, %v385
    %v388 = vadd.s32 %v387, %v377
    %v389 = vadd.s32 %v388, %v379
    %v390 = vand.u32 %v367, 65535
    %v391 = vshrl.u32 %v367, 16
    %v392 = vand.u32 %v362, 65535
    %v393 = vshrl.u32 %v362, 16
    %v394 = vmul.u32 %v390, %v392
    %v395 = vmul.u32 %v390, %v393
    %v396 = vmul.u32 %v391, %v392
    %v397 = vmul.u32 %v391, %v393
    %v398 = vshll.u32 %v395, 16
    %v399 = vshrl.u32 %v395, 16
    %v400 = vshll.u32 %v396, 16
    %v401 = vshrl.u32 %v396, 16
    %vm402 = vc.u32 %v394, %v398
    %v403 = vsel %vm402, 1, 0
    %v404 = vadd.s32 %v394, %v398
    %v405 = vadd.s32 %v397, %v403
    %vm406 = vc.u32 %v404, %v400
    %v407 = vsel %vm406, 1, 0
    %v408 = vadd.s32 %v404, %v400
    %v409 = vadd.s32 %v405, %v407
    %v410 = vadd.s32 %v409, %v399
    %v411 = vadd.s32 %v410, %v401
    %v412 = vmul.u32 %v367, %v358
    %v413 = vadd.s32 %v389, %v408
    %vm414 = vc.u32 %v389, %v408
    %v415 = vadd.s32 %v411, 1
    %v416 = vsel %vm414, %v415, %v411
    %v417 = vadd.s32 %v412, %v416
    %v418 = vadd.s32 %v417, 536870912
    %v419 = vshrl.u32 %v418, 30
    %v420 = vshll.u32 %v419, 30
    %v421 = vsub.s32 %v417, %v420
    %vm422 = vcmp.lt.s32.totalorder %v421, 0
    %v423 = vsub.s32 0, %v421
    %v424 = vsel %vm422, %v423, %v421
    %v425 = vclz %v424
    %v426 = vsub.s32 %v425, 2
    %vm427 = vcmp.gt.s32.totalorder 0, %v426
    %v428 = vsel %vm427, 0, %v426
    %v429 = vsub.s32 32, %v428
    %v430 = vshll.u32 %v421, %v428
    %v431 = vshrl.u32 %v413, %v429
    %v432 = vor.u32 %v430, %v431
    %v433 = vsub.s32 4294967266, %v428
    %v434 = vadd.s32 %v433, 127
    %v435 = vshll.u32 %v434, 23
    %v436 = vor.u32 4788187, %v435
    %v437 = vand.u32 2147483647, %v436
    %v439 = vcvt.s32.f32 %v432
    %v440 = vmul.f32 %v439, %v437
    %v441 = vxor.u32 %v440, 2147483648
    %v442 = vsel %vm321, %v441, %v440
    %v443 = vsub.s32 4, %v419
    %v444 = vsel %vm321, %v443, %v419
    %v445 = vsel %vm320, %v156, %v442
    %v446 = vsel %vm320, 0, %v444
    %v447 = vmul.f32 %v445, %v445
    %v448 = vmul.f32 %v447, -0.001358992
    %v449 = vadd.f32 %v448, 0.041655596
    %v450 = vmul.f32 %v447, %v449
    %v451 = vadd.f32 %v450, -0.4999988
    %v452 = vmul.f32 %v447, %v451
    %v453 = vadd.f32 1.0, %v452
    %v454 = vmul.f32 %v445, %v445
    %v455 = vmul.f32 %v454, -0.00019511016
    %v456 = vadd.f32 %v455, 0.008332121
    %v457 = vmul.f32 %v454, %v456
    %v458 = vadd.f32 %v457, -0.16666654
    %v459 = vmul.f32 %v454, %v458
    %v460 = vadd.f32 %v459, 1.0
    %v461 = vmul.f32 %v460, %v445
    %vm462 = vweird.f32 %v156
    %v463 = vadd.s32 %v446, 3
    %v464 = vand.u32 %v463, 3
    %vm465 = vcmp.lt.s32.totalorder %v464, 2
    %vm466 = vcmp.eq.s32.totalorder %v464, 0
    %v467 = vxor.u32 %v461, 2147483648
    %v468 = vsel %vm466, %v453, %v467
    %vm469 = vcmp.eq.s32.totalorder %v464, 2
    %v470 = vxor.u32 %v453, 2147483648
    %v471 = vsel %vm469, %v470, %v461
    %v472 = vsel %vm465, %v468, %v471
    %v473 = vsel %vm462, nan, %v472
    %v474 = vand.u32 2147483647, %v159
    %vm475 = vcmp.le.f32.partialorder %v474, 0.7853982
    %vm476 = vcmp.lt.s32.totalorder %v159, 0
    %v477 = vand.u32 %v159, 2139095040
    %v478 = vshrl.u32 %v477, 23
    %v479 = vsub.s32 %v478, 127
    %v480 = vand.u32 2147483647, %v159
    %v481 = vand.u32 %v480, 8388607
    %v482 = vor.u32 %v481, 8388608
    %v483 = vsub.s32 0, %v482
    %v484 = vadd.s32 %v479, 1
    %vm485 = vcmp.gt.s32.totalorder %v484, 0
    %v486 = vsel %vm485, %v484, 0
    %v487 = vshrl.u32 %v486, 5
    %v488 = vand.u32 %v486, 31
    %v489 = vsub.s32 32, %v488
    %v490 = vshrl.u32 683565275, %v489
    %v491 = vshll.u32 683565275, %v488
    %v492 = vshrl.u32 2475754826, %v489
    %v493 = vor.u32 %v491, %v492
    %v494 = vshll.u32 2475754826, %v488
    %v495 = vshrl.u32 2131351028, %v489
    %v496 = vor.u32 %v494, %v495
    %v497 = vshll.u32 2131351028, %v488
    %v498 = vshrl.u32 2102212464, %v489
    %v499 = vor.u32 %v497, %v498
    %v500 = vshll.u32 2102212464, %v488
    %v501 = vshrl.u32 920167782, %v489
    %v502 = vor.u32 %v500, %v501
    %v503 = vshll.u32 920167782, %v488
    %v504 = vshrl.u32 1326507024, %v489
    %v505 = vor.u32 %v503, %v504
    %vm506 = vcmp.lt.s32.totalorder %v487, 1
    %vm507 = vcmp.lt.s32.totalorder %v487, 2
    %vm508 = vcmp.lt.s32.totalorder %v487, 3
    %vm509 = vcmp.lt.s32.totalorder %v487, 4
    %v510 = vsel %vm506, %v490, %v493
    %v511 = vsel %vm509, %v499, 2102212464
    %v512 = vsel %vm508, %v496, %v511
    %v513 = vsel %vm507, %v510, %v512
    %v514 = vsel %vm506, %v493, %v496
    %v515 = vsel %vm509, %v502, 920167782
    %v516 = vsel %vm508, %v499, %v515
    %v517 = vsel %vm507, %v514, %v516
    %v518 = vsel %vm506, %v496, %v499
    %v519 = vsel %vm509, %v505, 1326507024
    %v520 = vsel %vm508, %v502, %v519
    %v521 = vsel %vm507, %v518, %v520
    %v522 = vshll.u32 %v482, 8
    %v523 = vand.u32 %v522, 65535
    %v524 = vshrl.u32 %v522, 16
    %v525 = vand.u32 %v521, 65535
    %v526 = vshrl.u32 %v521, 16
    %v527 = vmul.u32 %v523, %v525
    %v528 = vmul.u32 %v523, %v526
    %v529 = vmul.u32 %v524, %v525
    %v530 = vmul.u32 %v524, %v526
    %v531 = vshll.u32 %v528, 16
    %v532 = vshrl.u32 %v528, 16
    %v533 = vshll.u32 %v529, 16
    %v534 = vshrl.u32 %v529, 16
    %vm535 = vc.u32 %v527, %v531
    %v536 = vsel %vm535, 1, 0
    %v537 = vadd.s32 %v527, %v531
    %v538 = vadd.s32 %v530, %v536
    %vm539 = vc.u32 %v537, %v533
    %v540 = vsel %vm539, 1, 0
    %v541 = vadd.s32 %v537, %v533
    %v542 = vadd.s32 %v538, %v540
    %v543 = vadd.s32 %v542, %v532
    %v544 = vadd.s32 %v543, %v534
    %v545 = vand.u32 %v522, 65535
    %v546 = vshrl.u32 %v522, 16
    %v547 = vand.u32 %v517, 65535
    %v548 = vshrl.u32 %v517, 16
    %v549 = vmul.u32 %v545, %v547
    %v550 = vmul.u32 %v545, %v548
    %v551 = vmul.u32 %v546, %v547
    %v552 = vmul.u32 %v546, %v548
    %v553 = vshll.u32 %v550, 16
    %v554 = vshrl.u32 %v550, 16
    %v555 = vshll.u32 %v551, 16
    %v556 = vshrl.u32 %v551, 16
    %vm557 = vc.u32 %v549, %v553
    %v558 = vsel %vm557, 1, 0
    %v559 = vadd.s32 %v549, %v553
    %v560 = vadd.s32 %v552, %v558
    %vm561 = vc.u32 %v559, %v555
    %v562 = vsel %vm561, 1, 0
    %v563 = vadd.s32 %v559, %v555
    %v564 = vadd.s32 %v560, %v562
    %v565 = vadd.s32 %v564, %v554
    %v566 = vadd.s32 %v565, %v556
    %v567 = vmul.u32 %v522, %v513
    %v568 = vadd.s32 %v544, %v563
    %vm569 = vc.u32 %v544, %v563
    %v570 = vadd.s32 %v566, 1
    %v571 = vsel %vm569, %v570, %v566
    %v572 = vadd.s32 %v567, %v571
    %v573 = vadd.s32 %v572, 536870912
    %v574 = vshrl.u32 %v573, 30
    %v575 = vshll.u32 %v574, 30
    %v576 = vsub.s32 %v572, %v575
    %vm577 = vcmp.lt.s32.totalorder %v576, 0
    %v578 = vsub.s32 0, %v576
    %v579 = vsel %vm577, %v578, %v576
    %v580 = vclz %v579
    %v581 = vsub.s32 %v580, 2
    %vm582 = vcmp.gt.s32.totalorder 0, %v581
    %v583 = vsel %vm582, 0, %v581
    %v584 = vsub.s32 32, %v583
    %v585 = vshll.u32 %v576, %v583
    %v586 = vshrl.u32 %v568, %v584
    %v587 = vor.u32 %v585, %v586
    %v588 = vsub.s32 4294967266, %v583
    %v589 = vadd.s32 %v588, 127
    %v590 = vshll.u32 %v589, 23
    %v591 = vor.u32 4788187, %v590
    %v592 = vand.u32 2147483647, %v591
    %v594 = vcvt.s32.f32 %v587
    %v595 = vmul.f32 %v594, %v592
    %v596 = vxor.u32 %v595, 2147483648
    %v597 = vsel %vm476, %v596, %v595
    %v598 = vsub.s32 4, %v574
    %v599 = vsel %vm476, %v598, %v574
    %v600 = vsel %vm475, %v159, %v597
    %v601 = vsel %vm475, 0, %v599
    %v602 = vmul.f32 %v600, %v600
    %v603 = vmul.f32 %v602, -0.001358992
    %v604 = vadd.f32 %v603, 0.041655596
    %v605 = vmul.f32 %v602, %v604
    %v606 = vadd.f32 %v605, -0.4999988
    %v607 = vmul.f32 %v602, %v606
    %v608 = vadd.f32 1.0, %v607
    %v609 = vmul.f32 %v600, %v600
    %v610 = vmul.f32 %v609, -0.00019511016
    %v611 = vadd.f32 %v610, 0.008332121
    %v612 = vmul.f32 %v609, %v611
    %v613 = vadd.f32 %v612, -0.16666654
    %v614 = vmul.f32 %v609, %v613
    %v615 = vadd.f32 %v614, 1.0
    %v616 = vmul.f32 %v615, %v600
    %vm617 = vweird.f32 %v159
    %v618 = vadd.s32 %v601, 3
    %v619 = vand.u32 %v618, 3
    %vm620 = vcmp.lt.s32.totalorder %v619, 2
    %vm621 = vcmp.eq.s32.totalorder %v619, 0
    %v622 = vxor.u32 %v616, 2147483648
    %v623 = vsel %vm621, %v608, %v622
    %vm624 = vcmp.eq.s32.totalorder %v619, 2
    %v625 = vxor.u32 %v608, 2147483648
    %v626 = vsel %vm624, %v625, %v616
    %v627 = vsel %vm620, %v623, %v626
    %v628 = vsel %vm617, nan, %v627
    %v629 = vand.u32 2147483647, %v162
    %vm630 = vcmp.le.f32.partialorder %v629, 0.7853982
    %vm631 = vcmp.lt.s32.totalorder %v162, 0
    %v632 = vand.u32 %v162, 2139095040
    %v633 = vshrl.u32 %v632, 23
    %v634 = vsub.s32 %v633, 127
    %v635 = vand.u32 2147483647, %v162
    %v636 = vand.u32 %v635, 8388607
    %v637 = vor.u32 %v636, 8388608
    %v638 = vsub.s32 0, %v637
    %v639 = vadd.s32 %v634, 1
    %vm640 = vcmp.gt.s32.totalorder %v639, 0
    %v641 = vsel %vm640, %v639, 0
    %v642 = vshrl.u32 %v641, 5
    %v643 = vand.u32 %v641, 31
    %v644 = vsub.s32 32, %v643
    %v645 = vshrl.u32 683565275, %v644
    %v646 = vshll.u32 683565275, %v643
    %v647 = vshrl.u32 2475754826, %v644
    %v648 = vor.u32 %v646, %v647
    %v649 = vshll.u32 2475754826, %v643
    %v650 = vshrl.u32 2131351028, %v644
    %v651 = vor.u32 %v649, %v650
    %v652 = vshll.u32 2131351028, %v643
    %v653 = vshrl.u32 2102212464, %v644
    %v654 = vor.u32 %v652, %v653
    %v655 = vshll.u32 2102212464, %v643
    %v656 = vshrl.u32 920167782, %v644
    %v657 = vor.u32 %v655, %v656
    %v658 = vshll.u32 920167782, %v643
    %v659 = vshrl.u32 1326507024, %v644
    %v660 = vor.u32 %v658, %v659
    %vm661 = vcmp.lt.s32.totalorder %v642, 1
    %vm662 = vcmp.lt.s32.totalorder %v642, 2
    %vm663 = vcmp.lt.s32.totalorder %v642, 3
    %vm664 = vcmp.lt.s32.totalorder %v642, 4
    %v665 = vsel %vm661, %v645, %v648
    %v666 = vsel %vm664, %v654, 2102212464
    %v667 = vsel %vm663, %v651, %v666
    %v668 = vsel %vm662, %v665, %v667
    %v669 = vsel %vm661, %v648, %v651
    %v670 = vsel %vm664, %v657, 920167782
    %v671 = vsel %vm663, %v654, %v670
    %v672 = vsel %vm662, %v669, %v671
    %v673 = vsel %vm661, %v651, %v654
    %v674 = vsel %vm664, %v660, 1326507024
    %v675 = vsel %vm663, %v657, %v674
    %v676 = vsel %vm662, %v673, %v675
    %v677 = vshll.u32 %v637, 8
    %v678 = vand.u32 %v677, 65535
    %v679 = vshrl.u32 %v677, 16
    %v680 = vand.u32 %v676, 65535
    %v681 = vshrl.u32 %v676, 16
    %v682 = vmul.u32 %v678, %v680
    %v683 = vmul.u32 %v678, %v681
    %v684 = vmul.u32 %v679, %v680
    %v685 = vmul.u32 %v679, %v681
    %v686 = vshll.u32 %v683, 16
    %v687 = vshrl.u32 %v683, 16
    %v688 = vshll.u32 %v684, 16
    %v689 = vshrl.u32 %v684, 16
    %vm690 = vc.u32 %v682, %v686
    %v691 = vsel %vm690, 1, 0
    %v692 = vadd.s32 %v682, %v686
    %v693 = vadd.s32 %v685, %v691
    %vm694 = vc.u32 %v692, %v688
    %v695 = vsel %vm694, 1, 0
    %v696 = vadd.s32 %v692, %v688
    %v697 = vadd.s32 %v693, %v695
    %v698 = vadd.s32 %v697, %v687
    %v699 = vadd.s32 %v698, %v689
    %v700 = vand.u32 %v677, 65535
    %v701 = vshrl.u32 %v677, 16
    %v702 = vand.u32 %v672, 65535
    %v703 = vshrl.u32 %v672, 16
    %v704 = vmul.u32 %v700, %v702
    %v705 = vmul.u32 %v700, %v703
    %v706 = vmul.u32 %v701, %v702
    %v707 = vmul.u32 %v701, %v703
    %v708 = vshll.u32 %v705, 16
    %v709 = vshrl.u32 %v705, 16
    %v710 = vshll.u32 %v706, 16
    %v711 = vshrl.u32 %v706, 16
    %vm712 = vc.u32 %v704, %v708
    %v713 = vsel %vm712, 1, 0
    %v714 = vadd.s32 %v704, %v708
    %v715 = vadd.s32 %v707, %v713
    %vm716 = vc.u32 %v714, %v710
    %v717 = vsel %vm716, 1, 0
    %v718 = vadd.s32 %v714, %v710
    %v719 = vadd.s32 %v715, %v717
    %v720 = vadd.s32 %v719, %v709
    %v721 = vadd.s32 %v720, %v711
    %v722 = vmul.u32 %v677, %v668
    %v723 = vadd.s32 %v699, %v718
    %vm724 = vc.u32 %v699, %v718
    %v725 = vadd.s32 %v721, 1
    %v726 = vsel %vm724, %v725, %v721
    %v727 = vadd.s32 %v722, %v726
    %v728 = vadd.s32 %v727, 536870912
    %v729 = vshrl.u32 %v728, 30
    %v730 = vshll.u32 %v729, 30
    %v731 = vsub.s32 %v727, %v730
    %vm732 = vcmp.lt.s32.totalorder %v731, 0
    %v733 = vsub.s32 0, %v731
    %v734 = vsel %vm732, %v733, %v731
    %v735 = vclz %v734
    %v736 = vsub.s32 %v735, 2
    %vm737 = vcmp.gt.s32.totalorder 0, %v736
    %v738 = vsel %vm737, 0, %v736
    %v739 = vsub.s32 32, %v738
    %v740 = vshll.u32 %v731, %v738
    %v741 = vshrl.u32 %v723, %v739
    %v742 = vor.u32 %v740, %v741
    %v743 = vsub.s32 4294967266, %v738
    %v744 = vadd.s32 %v743, 127
    %v745 = vshll.u32 %v744, 23
    %v746 = vor.u32 4788187, %v745
    %v747 = vand.u32 2147483647, %v746
    %v749 = vcvt.s32.f32 %v742
    %v750 = vmul.f32 %v749, %v747
    %v751 = vxor.u32 %v750, 2147483648
    %v752 = vsel %vm631, %v751, %v750
    %v753 = vsub.s32 4, %v729
    %v754 = vsel %vm631, %v753, %v729
    %v755 = vsel %vm630, %v162, %v752
    %v756 = vsel %vm630, 0, %v754
    %v757 = vmul.f32 %v755, %v755
    %v758 = vmul.f32 %v757, -0.001358992
    %v759 = vadd.f32 %v758, 0.041655596
    %v760 = vmul.f32 %v757, %v759
    %v761 = vadd.f32 %v760, -0.4999988
    %v762 = vmul.f32 %v757, %v761
    %v763 = vadd.f32 1.0, %v762
    %v764 = vmul.f32 %v755, %v755
    %v765 = vmul.f32 %v764, -0.00019511016
    %v766 = vadd.f32 %v765, 0.008332121
    %v767 = vmul.f32 %v764, %v766
    %v768 = vadd.f32 %v767, -0.16666654
    %v769 = vmul.f32 %v764, %v768
    %v770 = vadd.f32 %v769, 1.0
    %v771 = vmul.f32 %v770, %v755
    %vm772 = vweird.f32 %v162
    %v773 = vadd.s32 %v756, 3
    %v774 = vand.u32 %v773, 3
    %vm775 = vcmp.lt.s32.totalorder %v774, 2
    %vm776 = vcmp.eq.s32.totalorder %v774, 0
    %v777 = vxor.u32 %v771, 2147483648
    %v778 = vsel %vm776, %v763, %v777
    %vm779 = vcmp.eq.s32.totalorder %v774, 2
    %v780 = vxor.u32 %v763, 2147483648
    %v781 = vsel %vm779, %v780, %v771
    %v782 = vsel %vm775, %v778, %v781
    %v783 = vsel %vm772, nan, %v782
    %v784 = vand.u32 2147483647, %v153
    %vm785 = vcmp.le.f32.partialorder %v784, 0.7853982
    %vm786 = vcmp.lt.s32.totalorder %v153, 0
    %v787 = vand.u32 %v153, 2139095040
    %v788 = vshrl.u32 %v787, 23
    %v789 = vsub.s32 %v788, 127
    %v790 = vand.u32 2147483647, %v153
    %v791 = vand.u32 %v790, 8388607
    %v792 = vor.u32 %v791, 8388608
    %v793 = vsub.s32 0, %v792
    %v794 = vadd.s32 %v789, 1
    %vm795 = vcmp.gt.s32.totalorder %v794, 0
    %v796 = vsel %vm795, %v794, 0
    %v797 = vshrl.u32 %v796, 5
    %v798 = vand.u32 %v796, 31
    %v799 = vsub.s32 32, %v798
    %v800 = vshrl.u32 683565275, %v799
    %v801 = vshll.u32 683565275, %v798
    %v802 = vshrl.u32 2475754826, %v799
    %v803 = vor.u32 %v801, %v802
    %v804 = vshll.u32 2475754826, %v798
    %v805 = vshrl.u32 2131351028, %v799
    %v806 = vor.u32 %v804, %v805
    %v807 = vshll.u32 2131351028, %v798
    %v808 = vshrl.u32 2102212464, %v799
    %v809 = vor.u32 %v807, %v808
    %v810 = vshll.u32 2102212464, %v798
    %v811 = vshrl.u32 920167782, %v799
    %v812 = vor.u32 %v810, %v811
    %v813 = vshll.u32 920167782, %v798
    %v814 = vshrl.u32 1326507024, %v799
    %v815 = vor.u32 %v813, %v814
    %vm816 = vcmp.lt.s32.totalorder %v797, 1
    %vm817 = vcmp.lt.s32.totalorder %v797, 2
    %vm818 = vcmp.lt.s32.totalorder %v797, 3
    %vm819 = vcmp.lt.s32.totalorder %v797, 4
    %v820 = vsel %vm816, %v800, %v803
    %v821 = vsel %vm819, %v809, 2102212464
    %v822 = vsel %vm818, %v806, %v821
    %v823 = vsel %vm817, %v820, %v822
    %v824 = vsel %vm816, %v803, %v806
    %v825 = vsel %vm819, %v812, 920167782
    %v826 = vsel %vm818, %v809, %v825
    %v827 = vsel %vm817, %v824, %v826
    %v828 = vsel %vm816, %v806, %v809
    %v829 = vsel %vm819, %v815, 1326507024
    %v830 = vsel %vm818, %v812, %v829
    %v831 = vsel %vm817, %v828, %v830
    %v832 = vshll.u32 %v792, 8
    %v833 = vand.u32 %v832, 65535
    %v834 = vshrl.u32 %v832, 16
    %v835 = vand.u32 %v831, 65535
    %v836 = vshrl.u32 %v831, 16
    %v837 = vmul.u32 %v833, %v835
    %v838 = vmul.u32 %v833, %v836
    %v839 = vmul.u32 %v834, %v835
    %v840 = vmul.u32 %v834, %v836
    %v841 = vshll.u32 %v838, 16
    %v842 = vshrl.u32 %v838, 16
    %v843 = vshll.u32 %v839, 16
    %v844 = vshrl.u32 %v839, 16
    %vm845 = vc.u32 %v837, %v841
    %v846 = vsel %vm845, 1, 0
    %v847 = vadd.s32 %v837, %v841
    %v848 = vadd.s32 %v840, %v846
    %vm849 = vc.u32 %v847, %v843
    %v850 = vsel %vm849, 1, 0
    %v851 = vadd.s32 %v847, %v843
    %v852 = vadd.s32 %v848, %v850
    %v853 = vadd.s32 %v852, %v842
    %v854 = vadd.s32 %v853, %v844
    %v855 = vand.u32 %v832, 65535
    %v856 = vshrl.u32 %v832, 16
    %v857 = vand.u32 %v827, 65535
    %v858 = vshrl.u32 %v827, 16
    %v859 = vmul.u32 %v855, %v857
    %v860 = vmul.u32 %v855, %v858
    %v861 = vmul.u32 %v856, %v857
    %v862 = vmul.u32 %v856, %v858
    %v863 = vshll.u32 %v860, 16
    %v864 = vshrl.u32 %v860, 16
    %v865 = vshll.u32 %v861, 16
    %v866 = vshrl.u32 %v861, 16
    %vm867 = vc.u32 %v859, %v863
    %v868 = vsel %vm867, 1, 0
    %v869 = vadd.s32 %v859, %v863
    %v870 = vadd.s32 %v862, %v868
    %vm871 = vc.u32 %v869, %v865
    %v872 = vsel %vm871, 1, 0
    %v873 = vadd.s32 %v869, %v865
    %v874 = vadd.s32 %v870, %v872
    %v875 = vadd.s32 %v874, %v864
    %v876 = vadd.s32 %v875, %v866
    %v877 = vmul.u32 %v832, %v823
    %v878 = vadd.s32 %v854, %v873
    %vm879 = vc.u32 %v854, %v873
    %v880 = vadd.s32 %v876, 1
    %v881 = vsel %vm879, %v880, %v876
    %v882 = vadd.s32 %v877, %v881
    %v883 = vadd.s32 %v882, 536870912
    %v884 = vshrl.u32 %v883, 30
    %v885 = vshll.u32 %v884, 30
    %v886 = vsub.s32 %v882, %v885
    %vm887 = vcmp.lt.s32.totalorder %v886, 0
    %v888 = vsub.s32 0, %v886
    %v889 = vsel %vm887, %v888, %v886
    %v890 = vclz %v889
    %v891 = vsub.s32 %v890, 2
    %vm892 = vcmp.gt.s32.totalorder 0, %v891
    %v893 = vsel %vm892, 0, %v891
    %v894 = vsub.s32 32, %v893
    %v895 = vshll.u32 %v886, %v893
    %v896 = vshrl.u32 %v878, %v894
    %v897 = vor.u32 %v895, %v896
    %v898 = vsub.s32 4294967266, %v893
    %v899 = vadd.s32 %v898, 127
    %v900 = vshll.u32 %v899, 23
    %v901 = vor.u32 4788187, %v900
    %v902 = vand.u32 2147483647, %v901
    %v904 = vcvt.s32.f32 %v897
    %v905 = vmul.f32 %v904, %v902
    %v906 = vxor.u32 %v905, 2147483648
    %v907 = vsel %vm786, %v906, %v905
    %v908 = vsub.s32 4, %v884
    %v909 = vsel %vm786, %v908, %v884
    %v910 = vsel %vm785, %v153, %v907
    %v911 = vsel %vm785, 0, %v909
    %v912 = vmul.f32 %v910, %v910
    %v913 = vmul.f32 %v912, -0.001358992
    %v914 = vadd.f32 %v913, 0.041655596
    %v915 = vmul.f32 %v912, %v914
    %v916 = vadd.f32 %v915, -0.4999988
    %v917 = vmul.f32 %v912, %v916
    %v918 = vadd.f32 1.0, %v917
    %v919 = vmul.f32 %v910, %v910
    %v920 = vmul.f32 %v919, -0.00019511016
    %v921 = vadd.f32 %v920, 0.008332121
    %v922 = vmul.f32 %v919, %v921
    %v923 = vadd.f32 %v922, -0.16666654
    %v924 = vmul.f32 %v919, %v923
    %v925 = vadd.f32 %v924, 1.0
    %v926 = vmul.f32 %v925, %v910
    %vm927 = vweird.f32 %v153
    %v928 = vand.u32 %v911, 3
    %vm929 = vcmp.lt.s32.totalorder %v928, 2
    %vm930 = vcmp.eq.s32.totalorder %v928, 0
    %v931 = vxor.u32 %v926, 2147483648
    %v932 = vsel %vm930, %v918, %v931
    %vm933 = vcmp.eq.s32.totalorder %v928, 2
    %v934 = vxor.u32 %v918, 2147483648
    %v935 = vsel %vm933, %v934, %v926
    %v936 = vsel %vm929, %v932, %v935
    %v937 = vsel %vm927, nan, %v936
    %v938 = vand.u32 2147483647, %v156
    %vm939 = vcmp.le.f32.partialorder %v938, 0.7853982
    %vm940 = vcmp.lt.s32.totalorder %v156, 0
    %v941 = vand.u32 %v156, 2139095040
    %v942 = vshrl.u32 %v941, 23
    %v943 = vsub.s32 %v942, 127
    %v944 = vand.u32 2147483647, %v156
    %v945 = vand.u32 %v944, 8388607
    %v946 = vor.u32 %v945, 8388608
    %v947 = vsub.s32 0, %v946
    %v948 = vadd.s32 %v943, 1
    %vm949 = vcmp.gt.s32.totalorder %v948, 0
    %v950 = vsel %vm949, %v948, 0
    %v951 = vshrl.u32 %v950, 5
    %v952 = vand.u32 %v950, 31
    %v953 = vsub.s32 32, %v952
    %v954 = vshrl.u32 683565275, %v953
    %v955 = vshll.u32 683565275, %v952
    %v956 = vshrl.u32 2475754826, %v953
    %v957 = vor.u32 %v955, %v956
    %v958 = vshll.u32 2475754826, %v952
    %v959 = vshrl.u32 2131351028, %v953
    %v960 = vor.u32 %v958, %v959
    %v961 = vshll.u32 2131351028, %v952
    %v962 = vshrl.u32 2102212464, %v953
    %v963 = vor.u32 %v961, %v962
    %v964 = vshll.u32 2102212464, %v952
    %v965 = vshrl.u32 920167782, %v953
    %v966 = vor.u32 %v964, %v965
    %v967 = vshll.u32 920167782, %v952
    %v968 = vshrl.u32 1326507024, %v953
    %v969 = vor.u32 %v967, %v968
    %vm970 = vcmp.lt.s32.totalorder %v951, 1
    %vm971 = vcmp.lt.s32.totalorder %v951, 2
    %vm972 = vcmp.lt.s32.totalorder %v951, 3
    %vm973 = vcmp.lt.s32.totalorder %v951, 4
    %v974 = vsel %vm970, %v954, %v957
    %v975 = vsel %vm973, %v963, 2102212464
    %v976 = vsel %vm972, %v960, %v975
    %v977 = vsel %vm971, %v974, %v976
    %v978 = vsel %vm970, %v957, %v960
    %v979 = vsel %vm973, %v966, 920167782
    %v980 = vsel %vm972, %v963, %v979
    %v981 = vsel %vm971, %v978, %v980
    %v982 = vsel %vm970, %v960, %v963
    %v983 = vsel %vm973, %v969, 1326507024
    %v984 = vsel %vm972, %v966, %v983
    %v985 = vsel %vm971, %v982, %v984
    %v986 = vshll.u32 %v946, 8
    %v987 = vand.u32 %v986, 65535
    %v988 = vshrl.u32 %v986, 16
    %v989 = vand.u32 %v985, 65535
    %v990 = vshrl.u32 %v985, 16
    %v991 = vmul.u32 %v987, %v989
    %v992 = vmul.u32 %v987, %v990
    %v993 = vmul.u32 %v988, %v989
    %v994 = vmul.u32 %v988, %v990
    %v995 = vshll.u32 %v992, 16
    %v996 = vshrl.u32 %v992, 16
    %v997 = vshll.u32 %v993, 16
    %v998 = vshrl.u32 %v993, 16
    %vm999 = vc.u32 %v991, %v995
    %v1000 = vsel %vm999, 1, 0
    %v1001 = vadd.s32 %v991, %v995
    %v1002 = vadd.s32 %v994, %v1000
    %vm1003 = vc.u32 %v1001, %v997
    %v1004 = vsel %vm1003, 1, 0
    %v1005 = vadd.s32 %v1001, %v997
    %v1006 = vadd.s32 %v1002, %v1004
    %v1007 = vadd.s32 %v1006, %v996
    %v1008 = vadd.s32 %v1007, %v998
    %v1009 = vand.u32 %v986, 65535
    %v1010 = vshrl.u32 %v986, 16
    %v1011 = vand.u32 %v981, 65535
    %v1012 = vshrl.u32 %v981, 16
    %v1013 = vmul.u32 %v1009, %v1011
    %v1014 = vmul.u32 %v1009, %v1012
    %v1015 = vmul.u32 %v1010, %v1011
    %v1016 = vmul.u32 %v1010, %v1012
    %v1017 = vshll.u32 %v1014, 16
    %v1018 = vshrl.u32 %v1014, 16
    %v1019 = vshll.u32 %v1015, 16
    %v1020 = vshrl.u32 %v1015, 16
    %vm1021 = vc.u32 %v1013, %v1017
    %v1022 = vsel %vm1021, 1, 0
    %v1023 = vadd.s32 %v1013, %v1017
    %v1024 = vadd.s32 %v1016, %v1022
    %vm1025 = vc.u32 %v1023, %v1019
    %v1026 = vsel %vm1025, 1, 0
    %v1027 = vadd.s32 %v1023, %v1019
    %v1028 = vadd.s32 %v1024, %v1026
    %v1029 = vadd.s32 %v1028, %v1018
    %v1030 = vadd.s32 %v1029, %v1020
    %v1031 = vmul.u32 %v986, %v977
    %v1032 = vadd.s32 %v1008, %v1027
    %vm1033 = vc.u32 %v1008, %v1027
    %v1034 = vadd.s32 %v1030, 1
    %v1035 = vsel %vm1033, %v1034, %v1030
    %v1036 = vadd.s32 %v1031, %v1035
    %v1037 = vadd.s32 %v1036, 536870912
    %v1038 = vshrl.u32 %v1037, 30
    %v1039 = vshll.u32 %v1038, 30
    %v1040 = vsub.s32 %v1036, %v1039
    %vm1041 = vcmp.lt.s32.totalorder %v1040, 0
    %v1042 = vsub.s32 0, %v1040
    %v1043 = vsel %vm1041, %v1042, %v1040
    %v1044 = vclz %v1043
    %v1045 = vsub.s32 %v1044, 2
    %vm1046 = vcmp.gt.s32.totalorder 0, %v1045
    %v1047 = vsel %vm1046, 0, %v1045
    %v1048 = vsub.s32 32, %v1047
    %v1049 = vshll.u32 %v1040, %v1047
    %v1050 = vshrl.u32 %v1032, %v1048
    %v1051 = vor.u32 %v1049, %v1050
    %v1052 = vsub.s32 4294967266, %v1047
    %v1053 = vadd.s32 %v1052, 127
    %v1054 = vshll.u32 %v1053, 23
    %v1055 = vor.u32 4788187, %v1054
    %v1056 = vand.u32 2147483647, %v1055
    %v1058 = vcvt.s32.f32 %v1051
    %v1059 = vmul.f32 %v1058, %v1056
    %v1060 = vxor.u32 %v1059, 2147483648
    %v1061 = vsel %vm940, %v1060, %v1059
    %v1062 = vsub.s32 4, %v1038
    %v1063 = vsel %vm940, %v1062, %v1038
    %v1064 = vsel %vm939, %v156, %v1061
    %v1065 = vsel %vm939, 0, %v1063
    %v1066 = vmul.f32 %v1064, %v1064
    %v1067 = vmul.f32 %v1066, -0.001358992
    %v1068 = vadd.f32 %v1067, 0.041655596
    %v1069 = vmul.f32 %v1066, %v1068
    %v1070 = vadd.f32 %v1069, -0.4999988
    %v1071 = vmul.f32 %v1066, %v1070
    %v1072 = vadd.f32 1.0, %v1071
    %v1073 = vmul.f32 %v1064, %v1064
    %v1074 = vmul.f32 %v1073, -0.00019511016
    %v1075 = vadd.f32 %v1074, 0.008332121
    %v1076 = vmul.f32 %v1073, %v1075
    %v1077 = vadd.f32 %v1076, -0.16666654
    %v1078 = vmul.f32 %v1073, %v1077
    %v1079 = vadd.f32 %v1078, 1.0
    %v1080 = vmul.f32 %v1079, %v1064
    %vm1081 = vweird.f32 %v156
    %v1082 = vand.u32 %v1065, 3
    %vm1083 = vcmp.lt.s32.totalorder %v1082, 2
    %vm1084 = vcmp.eq.s32.totalorder %v1082, 0
    %v1085 = vxor.u32 %v1080, 2147483648
    %v1086 = vsel %vm1084, %v1072, %v1085
    %vm1087 = vcmp.eq.s32.totalorder %v1082, 2
    %v1088 = vxor.u32 %v1072, 2147483648
    %v1089 = vsel %vm1087, %v1088, %v1080
    %v1090 = vsel %vm1083, %v1086, %v1089
    %v1091 = vsel %vm1081, nan, %v1090
    %v1092 = vand.u32 2147483647, %v159
    %vm1093 = vcmp.le.f32.partialorder %v1092, 0.7853982
    %vm1094 = vcmp.lt.s32.totalorder %v159, 0
    %v1095 = vand.u32 %v159, 2139095040
    %v1096 = vshrl.u32 %v1095, 23
    %v1097 = vsub.s32 %v1096, 127
    %v1098 = vand.u32 2147483647, %v159
    %v1099 = vand.u32 %v1098, 8388607
    %v1100 = vor.u32 %v1099, 8388608
    %v1101 = vsub.s32 0, %v1100
    %v1102 = vadd.s32 %v1097, 1
    %vm1103 = vcmp.gt.s32.totalorder %v1102, 0
    %v1104 = vsel %vm1103, %v1102, 0
    %v1105 = vshrl.u32 %v1104, 5
    %v1106 = vand.u32 %v1104, 31
    %v1107 = vsub.s32 32, %v1106
    %v1108 = vshrl.u32 683565275, %v1107
    %v1109 = vshll.u32 683565275, %v1106
    %v1110 = vshrl.u32 2475754826, %v1107
    %v1111 = vor.u32 %v1109, %v1110
    %v1112 = vshll.u32 2475754826, %v1106
    %v1113 = vshrl.u32 2131351028, %v1107
    %v1114 = vor.u32 %v1112, %v1113
    %v1115 = vshll.u32 2131351028, %v1106
    %v1116 = vshrl.u32 2102212464, %v1107
    %v1117 = vor.u32 %v1115, %v1116
    %v1118 = vshll.u32 2102212464, %v1106
    %v1119 = vshrl.u32 920167782, %v1107
    %v1120 = vor.u32 %v1118, %v1119
    %v1121 = vshll.u32 920167782, %v1106
    %v1122 = vshrl.u32 1326507024, %v1107
    %v1123 = vor.u32 %v1121, %v1122
    %vm1124 = vcmp.lt.s32.totalorder %v1105, 1
    %vm1125 = vcmp.lt.s32.totalorder %v1105, 2
    %vm1126 = vcmp.lt.s32.totalorder %v1105, 3
    %vm1127 = vcmp.lt.s32.totalorder %v1105, 4
    %v1128 = vsel %vm1124, %v1108, %v1111
    %v1129 = vsel %vm1127, %v1117, 2102212464
    %v1130 = vsel %vm1126, %v1114, %v1129
    %v1131 = vsel %vm1125, %v1128, %v1130
    %v1132 = vsel %vm1124, %v1111, %v1114
    %v1133 = vsel %vm1127, %v1120, 920167782
    %v1134 = vsel %vm1126, %v1117, %v1133
    %v1135 = vsel %vm1125, %v1132, %v1134
    %v1136 = vsel %vm1124, %v1114, %v1117
    %v1137 = vsel %vm1127, %v1123, 1326507024
    %v1138 = vsel %vm1126, %v1120, %v1137
    %v1139 = vsel %vm1125, %v1136, %v1138
    %v1140 = vshll.u32 %v1100, 8
    %v1141 = vand.u32 %v1140, 65535
    %v1142 = vshrl.u32 %v1140, 16
    %v1143 = vand.u32 %v1139, 65535
    %v1144 = vshrl.u32 %v1139, 16
    %v1145 = vmul.u32 %v1141, %v1143
    %v1146 = vmul.u32 %v1141, %v1144
    %v1147 = vmul.u32 %v1142, %v1143
    %v1148 = vmul.u32 %v1142, %v1144
    %v1149 = vshll.u32 %v1146, 16
    %v1150 = vshrl.u32 %v1146, 16
    %v1151 = vshll.u32 %v1147, 16
    %v1152 = vshrl.u32 %v1147, 16
    %vm1153 = vc.u32 %v1145, %v1149
    %v1154 = vsel %vm1153, 1, 0
    %v1155 = vadd.s32 %v1145, %v1149
    %v1156 = vadd.s32 %v1148, %v1154
    %vm1157 = vc.u32 %v1155, %v1151
    %v1158 = vsel %vm1157, 1, 0
    %v1159 = vadd.s32 %v1155, %v1151
    %v1160 = vadd.s32 %v1156, %v1158
    %v1161 = vadd.s32 %v1160, %v1150
    %v1162 = vadd.s32 %v1161, %v1152
    %v1163 = vand.u32 %v1140, 65535
    %v1164 = vshrl.u32 %v1140, 16
    %v1165 = vand.u32 %v1135, 65535
    %v1166 = vshrl.u32 %v1135, 16
    %v1167 = vmul.u32 %v1163, %v1165
    %v1168 = vmul.u32 %v1163, %v1166
    %v1169 = vmul.u32 %v1164, %v1165
    %v1170 = vmul.u32 %v1164, %v1166
    %v1171 = vshll.u32 %v1168, 16
    %v1172 = vshrl.u32 %v1168, 16
    %v1173 = vshll.u32 %v1169, 16
    %v1174 = vshrl.u32 %v1169, 16
    %vm1175 = vc.u32 %v1167, %v1171
    %v1176 = vsel %vm1175, 1, 0
    %v1177 = vadd.s32 %v1167, %v1171
    %v1178 = vadd.s32 %v1170, %v1176
    %vm1179 = vc.u32 %v1177, %v1173
    %v1180 = vsel %vm1179, 1, 0
    %v1181 = vadd.s32 %v1177, %v1173
    %v1182 = vadd.s32 %v1178, %v1180
    %v1183 = vadd.s32 %v1182, %v1172
    %v1184 = vadd.s32 %v1183, %v1174
    %v1185 = vmul.u32 %v1140, %v1131
    %v1186 = vadd.s32 %v1162, %v1181
    %vm1187 = vc.u32 %v1162, %v1181
    %v1188 = vadd.s32 %v1184, 1
    %v1189 = vsel %vm1187, %v1188, %v1184
    %v1190 = vadd.s32 %v1185, %v1189
    %v1191 = vadd.s32 %v1190, 536870912
    %v1192 = vshrl.u32 %v1191, 30
    %v1193 = vshll.u32 %v1192, 30
    %v1194 = vsub.s32 %v1190, %v1193
    %vm1195 = vcmp.lt.s32.totalorder %v1194, 0
    %v1196 = vsub.s32 0, %v1194
    %v1197 = vsel %vm1195, %v1196, %v1194
    %v1198 = vclz %v1197
    %v1199 = vsub.s32 %v1198, 2
    %vm1200 = vcmp.gt.s32.totalorder 0, %v1199
    %v1201 = vsel %vm1200, 0, %v1199
    %v1202 = vsub.s32 32, %v1201
    %v1203 = vshll.u32 %v1194, %v1201
    %v1204 = vshrl.u32 %v1186, %v1202
    %v1205 = vor.u32 %v1203, %v1204
    %v1206 = vsub.s32 4294967266, %v1201
    %v1207 = vadd.s32 %v1206, 127
    %v1208 = vshll.u32 %v1207, 23
    %v1209 = vor.u32 4788187, %v1208
    %v1210 = vand.u32 2147483647, %v1209
    %v1212 = vcvt.s32.f32 %v1205
    %v1213 = vmul.f32 %v1212, %v1210
    %v1214 = vxor.u32 %v1213, 2147483648
    %v1215 = vsel %vm1094, %v1214, %v1213
    %v1216 = vsub.s32 4, %v1192
    %v1217 = vsel %vm1094, %v1216, %v1192
    %v1218 = vsel %vm1093, %v159, %v1215
    %v1219 = vsel %vm1093, 0, %v1217
    %v1220 = vmul.f32 %v1218, %v1218
    %v1221 = vmul.f32 %v1220, -0.001358992
    %v1222 = vadd.f32 %v1221, 0.041655596
    %v1223 = vmul.f32 %v1220, %v1222
    %v1224 = vadd.f32 %v1223, -0.4999988
    %v1225 = vmul.f32 %v1220, %v1224
    %v1226 = vadd.f32 1.0, %v1225
    %v1227 = vmul.f32 %v1218, %v1218
    %v1228 = vmul.f32 %v1227, -0.00019511016
    %v1229 = vadd.f32 %v1228, 0.008332121
    %v1230 = vmul.f32 %v1227, %v1229
    %v1231 = vadd.f32 %v1230, -0.16666654
    %v1232 = vmul.f32 %v1227, %v1231
    %v1233 = vadd.f32 %v1232, 1.0
    %v1234 = vmul.f32 %v1233, %v1218
    %vm1235 = vweird.f32 %v159
    %v1236 = vand.u32 %v1219, 3
    %vm1237 = vcmp.lt.s32.totalorder %v1236, 2
    %vm1238 = vcmp.eq.s32.totalorder %v1236, 0
    %v1239 = vxor.u32 %v1234, 2147483648
    %v1240 = vsel %vm1238, %v1226, %v1239
    %vm1241 = vcmp.eq.s32.totalorder %v1236, 2
    %v1242 = vxor.u32 %v1226, 2147483648
    %v1243 = vsel %vm1241, %v1242, %v1234
    %v1244 = vsel %vm1237, %v1240, %v1243
    %v1245 = vsel %vm1235, nan, %v1244
    %v1246 = vand.u32 2147483647, %v162
    %vm1247 = vcmp.le.f32.partialorder %v1246, 0.7853982
    %vm1248 = vcmp.lt.s32.totalorder %v162, 0
    %v1249 = vand.u32 %v162, 2139095040
    %v1250 = vshrl.u32 %v1249, 23
    %v1251 = vsub.s32 %v1250, 127
    %v1252 = vand.u32 2147483647, %v162
    %v1253 = vand.u32 %v1252, 8388607
    %v1254 = vor.u32 %v1253, 8388608
    %v1255 = vsub.s32 0, %v1254
    %v1256 = vadd.s32 %v1251, 1
    %vm1257 = vcmp.gt.s32.totalorder %v1256, 0
    %v1258 = vsel %vm1257, %v1256, 0
    %v1259 = vshrl.u32 %v1258, 5
    %v1260 = vand.u32 %v1258, 31
    %v1261 = vsub.s32 32, %v1260
    %v1262 = vshrl.u32 683565275, %v1261
    %v1263 = vshll.u32 683565275, %v1260
    %v1264 = vshrl.u32 2475754826, %v1261
    %v1265 = vor.u32 %v1263, %v1264
    %v1266 = vshll.u32 2475754826, %v1260
    %v1267 = vshrl.u32 2131351028, %v1261
    %v1268 = vor.u32 %v1266, %v1267
    %v1269 = vshll.u32 2131351028, %v1260
    %v1270 = vshrl.u32 2102212464, %v1261
    %v1271 = vor.u32 %v1269, %v1270
    %v1272 = vshll.u32 2102212464, %v1260
    %v1273 = vshrl.u32 920167782, %v1261
    %v1274 = vor.u32 %v1272, %v1273
    %v1275 = vshll.u32 920167782, %v1260
    %v1276 = vshrl.u32 1326507024, %v1261
    %v1277 = vor.u32 %v1275, %v1276
    %vm1278 = vcmp.lt.s32.totalorder %v1259, 1
    %vm1279 = vcmp.lt.s32.totalorder %v1259, 2
    %vm1280 = vcmp.lt.s32.totalorder %v1259, 3
    %vm1281 = vcmp.lt.s32.totalorder %v1259, 4
    %v1282 = vsel %vm1278, %v1262, %v1265
    %v1283 = vsel %vm1281, %v1271, 2102212464
    %v1284 = vsel %vm1280, %v1268, %v1283
    %v1285 = vsel %vm1279, %v1282, %v1284
    %v1286 = vsel %vm1278, %v1265, %v1268
    %v1287 = vsel %vm1281, %v1274, 920167782
    %v1288 = vsel %vm1280, %v1271, %v1287
    %v1289 = vsel %vm1279, %v1286, %v1288
    %v1290 = vsel %vm1278, %v1268, %v1271
    %v1291 = vsel %vm1281, %v1277, 1326507024
    %v1292 = vsel %vm1280, %v1274, %v1291
    %v1293 = vsel %vm1279, %v1290, %v1292
    %v1294 = vshll.u32 %v1254, 8
    %v1295 = vand.u32 %v1294, 65535
    %v1296 = vshrl.u32 %v1294, 16
    %v1297 = vand.u32 %v1293, 65535
    %v1298 = vshrl.u32 %v1293, 16
    %v1299 = vmul.u32 %v1295, %v1297
    %v1300 = vmul.u32 %v1295, %v1298
    %v1301 = vmul.u32 %v1296, %v1297
    %v1302 = vmul.u32 %v1296, %v1298
    %v1303 = vshll.u32 %v1300, 16
    %v1304 = vshrl.u32 %v1300, 16
    %v1305 = vshll.u32 %v1301, 16
    %v1306 = vshrl.u32 %v1301, 16
    %vm1307 = vc.u32 %v1299, %v1303
    %v1308 = vsel %vm1307, 1, 0
    %v1309 = vadd.s32 %v1299, %v1303
    %v1310 = vadd.s32 %v1302, %v1308
    %vm1311 = vc.u32 %v1309, %v1305
    %v1312 = vsel %vm1311, 1, 0
    %v1313 = vadd.s32 %v1309, %v1305
    %v1314 = vadd.s32 %v1310, %v1312
    %v1315 = vadd.s32 %v1314, %v1304
    %v1316 = vadd.s32 %v1315, %v1306
    %v1317 = vand.u32 %v1294, 65535
    %v1318 = vshrl.u32 %v1294, 16
    %v1319 = vand.u32 %v1289, 65535
    %v1320 = vshrl.u32 %v1289, 16
    %v1321 = vmul.u32 %v1317, %v1319
    %v1322 = vmul.u32 %v1317, %v1320
    %v1323 = vmul.u32 %v1318, %v1319
    %v1324 = vmul.u32 %v1318, %v1320
    %v1325 = vshll.u32 %v1322, 16
    %v1326 = vshrl.u32 %v1322, 16
    %v1327 = vshll.u32 %v1323, 16
    %v1328 = vshrl.u32 %v1323, 16
    %vm1329 = vc.u32 %v1321, %v1325
    %v1330 = vsel %vm1329, 1, 0
    %v1331 = vadd.s32 %v1321, %v1325
    %v1332 = vadd.s32 %v1324, %v1330
    %vm1333 = vc.u32 %v1331, %v1327
    %v1334 = vsel %vm1333, 1, 0
    %v1335 = vadd.s32 %v1331, %v1327
    %v1336 = vadd.s32 %v1332, %v1334
    %v1337 = vadd.s32 %v1336, %v1326
    %v1338 = vadd.s32 %v1337, %v1328
    %v1339 = vmul.u32 %v1294, %v1285
    %v1340 = vadd.s32 %v1316, %v1335
    %vm1341 = vc.u32 %v1316, %v1335
    %v1342 = vadd.s32 %v1338, 1
    %v1343 = vsel %vm1341, %v1342, %v1338
    %v1344 = vadd.s32 %v1339, %v1343
    %v1345 = vadd.s32 %v1344, 536870912
    %v1346 = vshrl.u32 %v1345, 30
    %v1347 = vshll.u32 %v1346, 30
    %v1348 = vsub.s32 %v1344, %v1347
    %vm1349 = vcmp.lt.s32.totalorder %v1348, 0
    %v1350 = vsub.s32 0, %v1348
    %v1351 = vsel %vm1349, %v1350, %v1348
    %v1352 = vclz %v1351
    %v1353 = vsub.s32 %v1352, 2
    %vm1354 = vcmp.gt.s32.totalorder 0, %v1353
    %v1355 = vsel %vm1354, 0, %v1353
    %v1356 = vsub.s32 32, %v1355
    %v1357 = vshll.u32 %v1348, %v1355
    %v1358 = vshrl.u32 %v1340, %v1356
    %v1359 = vor.u32 %v1357, %v1358
    %v1360 = vsub.s32 4294967266, %v1355
    %v1361 = vadd.s32 %v1360, 127
    %v1362 = vshll.u32 %v1361, 23
    %v1363 = vor.u32 4788187, %v1362
    %v1364 = vand.u32 2147483647, %v1363
    %v1366 = vcvt.s32.f32 %v1359
    %v1367 = vmul.f32 %v1366, %v1364
    %v1368 = vxor.u32 %v1367, 2147483648
    %v1369 = vsel %vm1248, %v1368, %v1367
    %v1370 = vsub.s32 4, %v1346
    %v1371 = vsel %vm1248, %v1370, %v1346
    %v1372 = vsel %vm1247, %v162, %v1369
    %v1373 = vsel %vm1247, 0, %v1371
    %v1374 = vmul.f32 %v1372, %v1372
    %v1375 = vmul.f32 %v1374, -0.001358992
    %v1376 = vadd.f32 %v1375, 0.041655596
    %v1377 = vmul.f32 %v1374, %v1376
    %v1378 = vadd.f32 %v1377, -0.4999988
    %v1379 = vmul.f32 %v1374, %v1378
    %v1380 = vadd.f32 1.0, %v1379
    %v1381 = vmul.f32 %v1372, %v1372
    %v1382 = vmul.f32 %v1381, -0.00019511016
    %v1383 = vadd.f32 %v1382, 0.008332121
    %v1384 = vmul.f32 %v1381, %v1383
    %v1385 = vadd.f32 %v1384, -0.16666654
    %v1386 = vmul.f32 %v1381, %v1385
    %v1387 = vadd.f32 %v1386, 1.0
    %v1388 = vmul.f32 %v1387, %v1372
    %vm1389 = vweird.f32 %v162
    %v1390 = vand.u32 %v1373, 3
    %vm1391 = vcmp.lt.s32.totalorder %v1390, 2
    %vm1392 = vcmp.eq.s32.totalorder %v1390, 0
    %v1393 = vxor.u32 %v1388, 2147483648
    %v1394 = vsel %vm1392, %v1380, %v1393
    %vm1395 = vcmp.eq.s32.totalorder %v1390, 2
    %v1396 = vxor.u32 %v1380, 2147483648
    %v1397 = vsel %vm1395, %v1396, %v1388
    %v1398 = vsel %vm1391, %v1394, %v1397
    %v1399 = vsel %vm1389, nan, %v1398
    %v1400 = vmul.f32 %v318, 2.0
    %v1401 = vmul.f32 %v473, 2.0
    %v1402 = vmul.f32 %v628, 2.0
    %v1403 = vmul.f32 %v783, 2.0
    %v1404 = vmul.f32 %v1400, %v937
    %v1405 = vmul.f32 %v1401, %v1091
    %v1406 = vmul.f32 %v1402, %v1245
    %v1407 = vmul.f32 %v1403, %v1399
    %v1408 = vmul.f32 %v1400, %v318
    %v1409 = vmul.f32 %v1401, %v473
    %v1410 = vmul.f32 %v1402, %v628
    %v1411 = vmul.f32 %v1403, %v783
    %v1412 = vsub.f32 1.0, %v1408
    %v1413 = vsub.f32 1.0, %v1409
    %v1414 = vsub.f32 1.0, %v1410
    %v1415 = vsub.f32 1.0, %v1411
    %v1416 = vmul.f32 %v1404, 2.0
    %v1417 = vmul.f32 %v1405, 2.0
    %v1418 = vmul.f32 %v1406, 2.0
    %v1419 = vmul.f32 %v1407, 2.0
    %v1420 = vmul.f32 %v1416, %v1412
    %v1421 = vmul.f32 %v1417, %v1413
    %v1422 = vmul.f32 %v1418, %v1414
    %v1423 = vmul.f32 %v1419, %v1415
    %v1424 = vmul.f32 %v1416, %v1404
    %v1425 = vmul.f32 %v1417, %v1405
    %v1426 = vmul.f32 %v1418, %v1406
    %v1427 = vmul.f32 %v1419, %v1407
    %v1428 = vsub.f32 1.0, %v1424
    %v1429 = vsub.f32 1.0, %v1425
    %v1430 = vsub.f32 1.0, %v1426
    %v1431 = vsub.f32 1.0, %v1427
    %1432 = vst [vmem:[#allocation2] sm:$0xff] %v318
    %1433 = vst [vmem:[#allocation2 + $0x8] sm:$0xff] %v473
    %1434 = vst [vmem:[#allocation2 + $0x10] sm:$0xff] %v628
    %1435 = vst [vmem:[#allocation2 + $0x18] sm:$0xff] %v783
    %1436 = vst [vmem:[#allocation2 + $0x20] sm:$0xff] %v937
    %1437 = vst [vmem:[#allocation2 + $0x28] sm:$0xff] %v1091
    %1438 = vst [vmem:[#allocation2 + $0x30] sm:$0xff] %v1245
    %1439 = vst [vmem:[#allocation2 + $0x38] sm:$0xff] %v1399
    %1440 = vst [vmem:[#allocation2 + $0x40] sm:$0xff] %v1404
    %1441 = vst [vmem:[#allocation2 + $0x48] sm:$0xff] %v1405
    %1442 = vst [vmem:[#allocation2 + $0x50] sm:$0xff] %v1406
    %1443 = vst [vmem:[#allocation2 + $0x58] sm:$0xff] %v1407
    %1444 = vst [vmem:[#allocation2 + $0x60] sm:$0xff] %v1412
    %1445 = vst [vmem:[#allocation2 + $0x68] sm:$0xff] %v1413
    %1446 = vst [vmem:[#allocation2 + $0x70] sm:$0xff] %v1414
    %1447 = vst [vmem:[#allocation2 + $0x78] sm:$0xff] %v1415
    %1448 = vst [vmem:[#allocation2 + $0x80] sm:$0xff] %v1420
    %1449 = vst [vmem:[#allocation2 + $0x88] sm:$0xff] %v1421
    %1450 = vst [vmem:[#allocation2 + $0x90] sm:$0xff] %v1422
    %1451 = vst [vmem:[#allocation2 + $0x98] sm:$0xff] %v1423
    %1452 = vst [vmem:[#allocation2 + $0xa0] sm:$0xff] %v1428
    %1453 = vst [vmem:[#allocation2 + $0xa8] sm:$0xff] %v1429
    %1454 = vst [vmem:[#allocation2 + $0xb0] sm:$0xff] %v1430
    %1455 = vst [vmem:[#allocation2 + $0xb8] sm:$0xff] %v1431
    %v1456 = vld [vmem:[%s4] sm:$0xff]
    %v1457 = vld [vmem:[%s4 + $0x8] sm:$0xff]
    %v1458 = vld [vmem:[%s4 + $0x10] sm:$0xff]
    %v1459 = vld [vmem:[%s4 + $0x18] sm:$0xff]
    %v1460 = vld [vmem:[%s4 + $0x20] sm:$0xff]
    %v1461 = vld [vmem:[%s4 + $0x28] sm:$0xff]
    %v1462 = vld [vmem:[%s4 + $0x30] sm:$0xff]
    %v1463 = vld [vmem:[%s4 + $0x38] sm:$0xff]
    %v1464 = vld [vmem:[#allocation2] sm:$0xff]
    %v1465 = vld [vmem:[#allocation2 + $0x8] sm:$0xff]
    %v1466 = vld [vmem:[#allocation2 + $0x10] sm:$0xff]
    %v1467 = vld [vmem:[#allocation2 + $0x18] sm:$0xff]
    %v1468 = vld [vmem:[#allocation2 + $0x20] sm:$0xff]
    %v1469 = vld [vmem:[#allocation2 + $0x28] sm:$0xff]
    %v1470 = vld [vmem:[#allocation2 + $0x30] sm:$0xff]
    %v1471 = vld [vmem:[#allocation2 + $0x38] sm:$0xff]
    %v1472 = vld [vmem:[#allocation2 + $0x40] sm:$0xff]
    %v1473 = vld [vmem:[#allocation2 + $0x48] sm:$0xff]
    %v1474 = vld [vmem:[#allocation2 + $0x50] sm:$0xff]
    %v1475 = vld [vmem:[#allocation2 + $0x58] sm:$0xff]
    %v1476 = vld [vmem:[#allocation2 + $0x60] sm:$0xff]
    %v1477 = vld [vmem:[#allocation2 + $0x68] sm:$0xff]
    %v1478 = vld [vmem:[#allocation2 + $0x70] sm:$0xff]
    %v1479 = vld [vmem:[#allocation2 + $0x78] sm:$0xff]
    %v1480 = vld [vmem:[#allocation2 + $0x80] sm:$0xff]
    %v1481 = vld [vmem:[#allocation2 + $0x88] sm:$0xff]
    %v1482 = vld [vmem:[#allocation2 + $0x90] sm:$0xff]
    %v1483 = vld [vmem:[#allocation2 + $0x98] sm:$0xff]
    %v1484 = vld [vmem:[#allocation2 + $0xa0] sm:$0xff]
    %v1485 = vld [vmem:[#allocation2 + $0xa8] sm:$0xff]
    %v1486 = vld [vmem:[#allocation2 + $0xb0] sm:$0xff]
    %v1487 = vld [vmem:[#allocation2 + $0xb8] sm:$0xff]
    %v1488 = vld [vmem:[%s5] sm:$0xff]
    %v1489 = vld [vmem:[%s5 + $0x8] sm:$0xff]
    %v1490 = vld [vmem:[%s5 + $0x10] sm:$0xff]
    %v1491 = vld [vmem:[%s5 + $0x18] sm:$0xff]
    %1493 = vset.pattern.permute.xlu0 0
    %1494 = vperm.xlu0 %1493, %v1488
    %v1495 = vpop.permute.xlu0 %1494
    %1498 = vset.pattern.permute.xlu0 0
    %1499 = vperm.xlu0 %1498, %v1489
    %v1500 = vpop.permute.xlu0 %1499
    %1503 = vset.pattern.permute.xlu0 0
    %1504 = vperm.xlu0 %1503, %v1490
    %v1505 = vpop.permute.xlu0 %1504
    %1508 = vset.pattern.permute.xlu0 0
    %1509 = vperm.xlu0 %1508, %v1491
    %v1510 = vpop.permute.xlu0 %1509
    %v1513 = vsel %vm122, %v1457, 0
    %v1516 = vsel %vm122, %v1459, 0
    %v1519 = vsel %vm122, %v1461, 0
    %v1522 = vsel %vm122, %v1463, 0
    %1524 = vmatpush.msra.mxu0 %v1479
    %1525 = vmatpush.msra.mxu0 %v1478
    %1526 = vmatpush.msra.mxu0 %v1477
    %1527 = vmatpush.msra.mxu0 %v1476
    %1528 = vmatpush.msra.mxu0 %v1475
    %1529 = vmatpush.msra.mxu0 %v1474
    %1530 = vmatpush.msra.mxu0 %v1473
    %1531 = vmatpush.msra.mxu0 %v1472
    %1532 = vmatpush.msra.mxu0 %v1471
    %1533 = vmatpush.msra.mxu0 %v1470
    %1534 = vmatpush.msra.mxu0 %v1469
    %1535 = vmatpush.msra.mxu0 %v1468
    %1536 = vmatpush.msra.mxu0 %v1467
    %1537 = vmatpush.msra.mxu0 %v1466
    %1538 = vmatpush.msra.mxu0 %v1465
    %1539 = vmatpush.msra.mxu0 %v1464
    %1540 = vmatmul.f32.gmra.mxu0 %v1456
    %v1541 = vpop.f32.mrf.mxu0
    %v1542 = vadd.f32 %v1495, %v1541
    %1543 = vmatmul.f32.gmra.mxu0 %v1458
    %v1544 = vpop.f32.mrf.mxu0
    %v1545 = vadd.f32 %v1500, %v1544
    %1546 = vmatmul.f32.gmra.mxu0 %v1460
    %v1547 = vpop.f32.mrf.mxu0
    %v1548 = vadd.f32 %v1505, %v1547
    %1549 = vmatmul.f32.gmra.mxu0 %v1462
    %v1550 = vpop.f32.mrf.mxu0
    %v1551 = vadd.f32 %v1510, %v1550
    %1552 = vdwg.mxu0
    %1553 = vmatpush.msra.mxu0 0.0
    %1554 = vmatpush.msra.mxu0 0.0
    %1555 = vmatpush.msra.mxu0 0.0
    %1556 = vmatpush.msra.mxu0 0.0
    %1557 = vmatpush.msra.mxu0 0.0
    %1558 = vmatpush.msra.mxu0 0.0
    %1559 = vmatpush.msra.mxu0 0.0
    %1560 = vmatpush.msra.mxu0 0.0
    %1561 = vmatpush.msra.mxu0 %v1487
    %1562 = vmatpush.msra.mxu0 %v1486
    %1563 = vmatpush.msra.mxu0 %v1485
    %1564 = vmatpush.msra.mxu0 %v1484
    %1565 = vmatpush.msra.mxu0 %v1483
    %1566 = vmatpush.msra.mxu0 %v1482
    %1567 = vmatpush.msra.mxu0 %v1481
    %1568 = vmatpush.msra.mxu0 %v1480
    %1569 = vmatmul.f32.gmra.mxu0 %v1513
    %v1570 = vpop.f32.mrf.mxu0
    %v1571 = vadd.f32 %v1542, %v1570
    %1572 = vmatmul.f32.gmra.mxu0 %v1516
    %v1573 = vpop.f32.mrf.mxu0
    %v1574 = vadd.f32 %v1545, %v1573
    %1575 = vmatmul.f32.gmra.mxu0 %v1519
    %v1576 = vpop.f32.mrf.mxu0
    %v1577 = vadd.f32 %v1548, %v1576
    %1578 = vmatmul.f32.gmra.mxu0 %v1522
    %v1579 = vpop.f32.mrf.mxu0
    %v1580 = vadd.f32 %v1551, %v1579
    %1581 = vdwg.mxu0
    %1582 = vst [vmem:[#allocation8] sm:$0xff] %v1571
    %1583 = vst [vmem:[#allocation8 + $0x8] sm:$0xff] %v1574
    %1584 = vst [vmem:[#allocation8 + $0x10] sm:$0xff] %v1577
    %1585 = vst [vmem:[#allocation8 + $0x18] sm:$0xff] %v1580
    // Predicated region
    $region34: #{tpu_custom_call.1} parent=1 // pred_check
      _
    $region35: #{tpu_custom_call.1} parent=1 // pred_check_branch
      %1587 = sbr.rel (0) target = $region37
    $region36: #{tpu_custom_call.1} parent=1 // pred_region
      %1589 = vsyncadd [#allocation5], 0
      %s1590 = sshll.u32 [#allocation8], 4
      %s1591 = int_to_ptr.vmem [resolvable:$true] %s1590
      %s1592 = sshll.u32 %s6, 4
      %s1593 = int_to_ptr.hbm [resolvable:$true] %s1592
      %1598 = dma.vmem_to_hbm [thread:$0]  %s1591, 512, %s1593, [#allocation5], 128, 128, 8
    $region37: #{tpu_custom_call.1} parent=1 // pred_fallthru
      _
    // Predicated region
    $region38: #{tpu_custom_call.1} parent=1 // pred_check
      _
    $region39: #{tpu_custom_call.1} parent=1 // pred_check_branch
      %1600 = sbr.rel (0) target = $region41
    $region40: #{tpu_custom_call.1} parent=1 // pred_region
      %1602 = dma.done [#allocation5], 512
    $region41: #{tpu_custom_call.1} parent=1 // pred_fallthru
      _
    %1603 = vsyncpa [#allocation4], 1
    %1604 = vsyncpa [#allocation7], 1
    %1605 = vsyncpa [#allocation5], 1

</llo_original>
